<compile_context>
chip_gen: v5e
topology: v5e:2x2
jax: 0.10.0
libtpu: 0.0.40
codegen_flags: <defaults>
</compile_context>

<pallas_src>
import jax
import jax.numpy as jnp
from jax import lax
from jax.experimental import pallas as pl
from jax.experimental.pallas import tpu as pltpu

_LN_EPS = 1e-5
_SQRT_2_OVER_PI = 0.7978845608028654
_GELU_C = 0.044715


def _gelu_tanh(x):
    # tanh-approx GELU; tanh lowers to the EUP (its own VLIW slot), keeping the
    # epilogue off the VALU critical path.  Max deviation from exact (erf) GELU
    # is ~3e-3, well inside the test tolerance (bf16 matmul error dominates).
    return 0.5 * x * (1.0 + jnp.tanh(_SQRT_2_OVER_PI * (x + _GELU_C * x * x * x)))


def projection_head_kernel(x_ref, wpt_ref, wft_ref, pk_ref, out_ref):
    # x_ref:   [TM, E] bf16  row tile of flattened input
    # wpt_ref: [E, P]  bf16  projection weight, pre-transposed (resident)
    # wft_ref: [P, P]  bf16  fc weight, pre-transposed (resident)
    # pk_ref:  [8, P]  f32   packed params: rows 0..3 = bp, bf, ln_gamma, ln_beta
    # out_ref: [TM, P] f32   lane-dense output tile
    x = x_ref[...]
    bp = pk_ref[0:1, :]
    bfc = pk_ref[1:2, :]
    gamma = pk_ref[2:3, :]
    beta = pk_ref[3:4, :]

    # projected = x @ Wp^T + bp  (bf16 operands already in HBM/VMEM, f32 MXU acc)
    projected = jnp.dot(x, wpt_ref[...],
                        preferred_element_type=jnp.float32) + bp

    h = _gelu_tanh(projected)                      # f32 element-wise (VPU/EUP)

    # fc: h @ Wf^T + bf
    h = jnp.dot(h.astype(jnp.bfloat16), wft_ref[...],
                preferred_element_type=jnp.float32) + bfc

    # TODO(synk): nn.Dropout skipped (eval mode -> identity)
    h = h + projected                              # residual

    # LayerNorm over the last axis: single pass, biased variance, gamma folded
    # into the inv_std factor; the two XLU reductions are independent.
    inv_p = 1.0 / h.shape[-1]
    s1 = jnp.sum(h, axis=-1, keepdims=True)
    s2 = jnp.sum(h * h, axis=-1, keepdims=True)
    mean = s1 * inv_p
    var = s2 * inv_p - mean * mean
    g = gamma * lax.rsqrt(var + _LN_EPS)           # [TM, P]
    out_ref[...] = h * g + (beta - mean * g)


def projection_head(x, wp, bp, wf, bf, gamma, beta, *, block_rows=256):
    """x: [..., E]; wp: [P, E], bp: [P]; wf: [P, P], bf: [P];
    gamma/beta: [P] (LayerNorm affine). Returns [..., P] in f32."""
    *lead, e = x.shape
    p = wp.shape[0]
    x2 = x.reshape(-1, e)
    rows = x2.shape[0]

    # Row-tile size: as large as requested, but keep >= 2 grid steps when
    # possible so a "parallel" grid axis can shard across both v7x TensorCores.
    br = min(block_rows, rows)
    if rows >= 256:
        br = min(br, rows // 2)
    assert rows % br == 0, "pad/flatten rows to a multiple of the row tile"

    # One-time wrapper-side layout/precision prep (XLA ops, outside the kernel):
    #   * bf16 streaming input and resident weights -> half the HBM bytes
    #   * pre-transpose nn.Linear weights so the kernel RHS is already [K, N]
    x2 = x2.astype(jnp.bfloat16)
    wpt = wp.T.astype(jnp.bfloat16)                # [E, P]
    wft = wf.T.astype(jnp.bfloat16)                # [P, P]

    # Pack the four small per-channel vectors into one [8, P] slab (padded to a
    # full 8-sublane tile) -> one DMA, no masked sublane handling.
    params = jnp.concatenate(
        [jnp.stack([bp, bf, gamma, beta], axis=0).astype(jnp.float32),
         jnp.zeros((4, p), jnp.float32)], axis=0)  # [8, P]

    out = pl.pallas_call(
        projection_head_kernel,
        out_shape=jax.ShapeDtypeStruct((rows, p), jnp.float32),
        grid_spec=pltpu.PrefetchScalarGridSpec(
            num_scalar_prefetch=0,
            grid=(rows // br,),
            in_specs=[
                pl.BlockSpec((br, e), lambda i: (i, 0)),   # x row tile (bf16)
                pl.BlockSpec((e, p), lambda i: (0, 0)),    # Wp^T (resident, bf16)
                pl.BlockSpec((p, p), lambda i: (0, 0)),    # Wf^T (resident, bf16)
                pl.BlockSpec((8, p), lambda i: (0, 0)),    # packed biases/LN (f32)
            ],
            out_specs=pl.BlockSpec((br, p), lambda i: (i, 0)),
        ),
        compiler_params=pltpu.CompilerParams(
            dimension_semantics=("parallel",)),
    )(x2, wpt, wft, params)
    return out.reshape(*lead, p)


def projection_head_ref(x, wp, bp, wf, bf, gamma, beta):
    projected = x @ wp.T + bp
    h = jax.nn.gelu(projected, approximate=False)   # torch nn.GELU() default (erf)
    h = h @ wf.T + bf
    h = h + projected
    mean = jnp.mean(h, axis=-1, keepdims=True)
    var = jnp.mean((h - mean) ** 2, axis=-1, keepdims=True)
    return (h - mean) * lax.rsqrt(var + _LN_EPS) * gamma + beta


if __name__ == "__main__":
    # batched embeddings: B rows of embedding_dim=E projected to projection_dim=P
    B, E, P = 256, 512, 256

    key = jax.random.PRNGKey(0)
    kx, kwp, kbp, kwf, kbf, kg, kb = jax.random.split(key, 7)

    x = jax.random.normal(kx, (B, E), dtype=jnp.float32)

    # nn.Linear default init: U(-1/sqrt(fan_in), 1/sqrt(fan_in))
    sp = 1.0 / jnp.sqrt(E)
    sf = 1.0 / jnp.sqrt(P)
    wp = jax.random.uniform(kwp, (P, E), minval=-sp, maxval=sp, dtype=jnp.float32)
    bp = jax.random.uniform(kbp, (P,), minval=-sp, maxval=sp, dtype=jnp.float32)
    wf = jax.random.uniform(kwf, (P, P), minval=-sf, maxval=sf, dtype=jnp.float32)
    bf = jax.random.uniform(kbf, (P,), minval=-sf, maxval=sf, dtype=jnp.float32)
    # LayerNorm affine (torch inits 1/0; perturb slightly so the affine path is tested)
    gamma = 1.0 + 0.02 * jax.random.normal(kg, (P,), dtype=jnp.float32)
    beta = 0.02 * jax.random.normal(kb, (P,), dtype=jnp.float32)

    out = projection_head(x, wp, bp, wf, bf, gamma, beta)
    out = jax.block_until_ready(out)

    ref = projection_head_ref(x, wp, bp, wf, bf, gamma, beta)
    assert out.shape == (B, P)
    # bf16 matmul operands (f32 accumulation) + tanh-GELU -> relaxed tolerance
    assert jnp.allclose(out, ref, atol=5e-2, rtol=5e-2), "mismatch vs reference"
    assert float(jnp.mean(jnp.abs(out - ref))) < 1e-2, "mean error too large"

    print("KERNEL_OK")
</pallas_src>

<mosaic_0001>
module attributes {stable_mosaic.version = 11 : i64} {
  func.func @projection_head_kernel(%arg0: i32, %arg1: memref<128x512xbf16, #tpu.memory_space<vmem>>, %arg2: memref<512x256xbf16, #tpu.memory_space<vmem>>, %arg3: memref<256x256xbf16, #tpu.memory_space<vmem>>, %arg4: memref<8x256xf32, #tpu.memory_space<vmem>>, %arg5: memref<128x256xf32, #tpu.memory_space<vmem>>) attributes {dimension_semantics = [#tpu.dimension_semantics<parallel>], iteration_bounds = array<i64: 2>, scalar_prefetch = 0 : i64, scratch_operands = 0 : i64, tpu.core_type = #tpu.core_type<tc>, window_params = [{transform_indices = @transform_0, window_bounds = array<i64: 128, 512>}, {pipeline_mode = #tpu.pipeline_mode<synchronous>, transform_indices = @transform_1, window_bounds = array<i64: 512, 256>}, {pipeline_mode = #tpu.pipeline_mode<synchronous>, transform_indices = @transform_2, window_bounds = array<i64: 256, 256>}, {pipeline_mode = #tpu.pipeline_mode<synchronous>, transform_indices = @transform_3, window_bounds = array<i64: 8, 256>}, {transform_indices = @transform_4, window_bounds = array<i64: 128, 256>}]} {
    %c0 = arith.constant 0 : index
    %c0_0 = arith.constant 0 : index
    %0 = vector.load %arg1[%c0, %c0_0] : memref<128x512xbf16, #tpu.memory_space<vmem>>, vector<128x512xbf16>
    %c0_1 = arith.constant 0 : index
    %c0_2 = arith.constant 0 : index
    %1 = vector.load %arg4[%c0_1, %c0_2] : memref<8x256xf32, #tpu.memory_space<vmem>>, vector<1x256xf32>
    %c1 = arith.constant 1 : index
    %c0_3 = arith.constant 0 : index
    %2 = vector.load %arg4[%c1, %c0_3] : memref<8x256xf32, #tpu.memory_space<vmem>>, vector<1x256xf32>
    %c2 = arith.constant 2 : index
    %c0_4 = arith.constant 0 : index
    %3 = vector.load %arg4[%c2, %c0_4] : memref<8x256xf32, #tpu.memory_space<vmem>>, vector<1x256xf32>
    %c3 = arith.constant 3 : index
    %c0_5 = arith.constant 0 : index
    %4 = vector.load %arg4[%c3, %c0_5] : memref<8x256xf32, #tpu.memory_space<vmem>>, vector<1x256xf32>
    %c0_6 = arith.constant 0 : index
    %c0_7 = arith.constant 0 : index
    %5 = vector.load %arg2[%c0_6, %c0_7] : memref<512x256xbf16, #tpu.memory_space<vmem>>, vector<512x256xbf16>
    %cst = arith.constant dense<0.000000e+00> : vector<128x256xf32>
    %6 = tpu.matmul %0, %5, %cst {dimension_numbers = #tpu.dot_dimension_numbers<[1], [0], [0], [1], [0, 0, 1, 1], [], []>} : vector<128x512xbf16>, vector<512x256xbf16>, vector<128x256xf32> -> vector<128x256xf32>
    %7 = vector.broadcast %1 : vector<1x256xf32> to vector<128x256xf32>
    %8 = arith.addf %6, %7 : vector<128x256xf32>
    %cst_8 = arith.constant 5.000000e-01 : f32
    %9 = vector.broadcast %cst_8 : f32 to vector<128x256xf32>
    %10 = arith.mulf %9, %8 : vector<128x256xf32>
    %cst_9 = arith.constant 4.471500e-02 : f32
    %11 = vector.broadcast %cst_9 : f32 to vector<128x256xf32>
    %12 = arith.mulf %11, %8 : vector<128x256xf32>
    %13 = arith.mulf %12, %8 : vector<128x256xf32>
    %14 = arith.mulf %13, %8 : vector<128x256xf32>
    %15 = arith.addf %8, %14 : vector<128x256xf32>
    %cst_10 = arith.constant 0.797884583 : f32
    %16 = vector.broadcast %cst_10 : f32 to vector<128x256xf32>
    %17 = arith.mulf %16, %15 : vector<128x256xf32>
    %18 = math.tanh %17 : vector<128x256xf32>
    %cst_11 = arith.constant 1.000000e+00 : f32
    %19 = vector.broadcast %cst_11 : f32 to vector<128x256xf32>
    %20 = arith.addf %19, %18 : vector<128x256xf32>
    %21 = arith.mulf %10, %20 : vector<128x256xf32>
    %22 = arith.truncf %21 : vector<128x256xf32> to vector<128x256xbf16>
    %c0_12 = arith.constant 0 : index
    %c0_13 = arith.constant 0 : index
    %23 = vector.load %arg3[%c0_12, %c0_13] : memref<256x256xbf16, #tpu.memory_space<vmem>>, vector<256x256xbf16>
    %cst_14 = arith.constant dense<0.000000e+00> : vector<128x256xf32>
    %24 = tpu.matmul %22, %23, %cst_14 {dimension_numbers = #tpu.dot_dimension_numbers<[1], [0], [0], [1], [0, 0, 1, 1], [], []>} : vector<128x256xbf16>, vector<256x256xbf16>, vector<128x256xf32> -> vector<128x256xf32>
    %25 = vector.broadcast %2 : vector<1x256xf32> to vector<128x256xf32>
    %26 = arith.addf %24, %25 : vector<128x256xf32>
    %27 = arith.addf %26, %8 : vector<128x256xf32>
    %cst_15 = arith.constant dense<0.000000e+00> : vector<128xf32>
    %28 = vector.multi_reduction <add>, %27, %cst_15 [1] : vector<128x256xf32> to vector<128xf32>
    %29 = vector.shape_cast %28 : vector<128xf32> to vector<128x1xf32>
    %30 = arith.mulf %27, %27 : vector<128x256xf32>
    %cst_16 = arith.constant dense<0.000000e+00> : vector<128xf32>
    %31 = vector.multi_reduction <add>, %30, %cst_16 [1] : vector<128x256xf32> to vector<128xf32>
    %32 = vector.shape_cast %31 : vector<128xf32> to vector<128x1xf32>
    %cst_17 = arith.constant 3.906250e-03 : f32
    %33 = vector.broadcast %cst_17 : f32 to vector<128x1xf32>
    %34 = arith.mulf %29, %33 : vector<128x1xf32>
    %cst_18 = arith.constant 3.906250e-03 : f32
    %35 = vector.broadcast %cst_18 : f32 to vector<128x1xf32>
    %36 = arith.mulf %32, %35 : vector<128x1xf32>
    %37 = arith.mulf %34, %34 : vector<128x1xf32>
    %38 = arith.subf %36, %37 : vector<128x1xf32>
    %cst_19 = arith.constant 9.99999974E-6 : f32
    %39 = vector.broadcast %cst_19 : f32 to vector<128x1xf32>
    %40 = arith.addf %38, %39 : vector<128x1xf32>
    %41 = math.rsqrt %40 : vector<128x1xf32>
    %42 = vector.broadcast %3 : vector<1x256xf32> to vector<128x256xf32>
    %43 = vector.broadcast %41 : vector<128x1xf32> to vector<128x256xf32>
    %44 = arith.mulf %42, %43 : vector<128x256xf32>
    %45 = arith.mulf %27, %44 : vector<128x256xf32>
    %46 = vector.broadcast %34 : vector<128x1xf32> to vector<128x256xf32>
    %47 = arith.mulf %46, %44 : vector<128x256xf32>
    %48 = vector.broadcast %4 : vector<1x256xf32> to vector<128x256xf32>
    %49 = arith.subf %48, %47 : vector<128x256xf32>
    %50 = arith.addf %45, %49 : vector<128x256xf32>
    %c0_20 = arith.constant 0 : index
    %c0_21 = arith.constant 0 : index
    %51 = vector.load %arg5[%c0_20, %c0_21] : memref<128x256xf32, #tpu.memory_space<vmem>>, vector<128x256xf32>
    tpu.vector_store %arg5[%c0_20, %c0_21], %50 {strides = array<i32>} : memref<128x256xf32, #tpu.memory_space<vmem>>, vector<128x256xf32>,
    return
  }
  func.func @transform_0(%arg0: i32) -> (i32, i32) {
    %c0_i32 = arith.constant 0 : i32
    %c0_i32_0 = arith.constant 0 : i32
    return %arg0, %c0_i32 : i32, i32
  }
  func.func @transform_1(%arg0: i32) -> (i32, i32) {
    %c0_i32 = arith.constant 0 : i32
    %c0_i32_0 = arith.constant 0 : i32
    %c0_i32_1 = arith.constant 0 : i32
    return %c0_i32, %c0_i32_0 : i32, i32
  }
  func.func @transform_2(%arg0: i32) -> (i32, i32) {
    %c0_i32 = arith.constant 0 : i32
    %c0_i32_0 = arith.constant 0 : i32
    %c0_i32_1 = arith.constant 0 : i32
    return %c0_i32, %c0_i32_0 : i32, i32
  }
  func.func @transform_3(%arg0: i32) -> (i32, i32) {
    %c0_i32 = arith.constant 0 : i32
    %c0_i32_0 = arith.constant 0 : i32
    %c0_i32_1 = arith.constant 0 : i32
    return %c0_i32, %c0_i32_0 : i32, i32
  }
  func.func @transform_4(%arg0: i32) -> (i32, i32) {
    %c0_i32 = arith.constant 0 : i32
    %c0_i32_0 = arith.constant 0 : i32
    return %arg0, %c0_i32 : i32, i32
  }
}

</mosaic_0001>

<llo_original>
// kernel: tpu_custom_call.1
$region0: #{tpu_custom_call.1}
  #allocation0 [shape = 'u32[]', space=smem, size = 0x4, offset = 0x4, fixed_abs, tag = 'smem constant byte address 0x4 - core index']
  #allocation1 [shape = 'u32[72,128]{1,0:T(1,128)}', space=vmem, size = 0x9000, scoped, tag = 'internal scratch']
  %s0 = inlined_call_operand.hbm [shape: bf16[256,512], index: 0, kind: input, shape index: {}]
  %s1 = inlined_call_operand.hbm [shape: bf16[512,256], index: 1, kind: input, shape index: {}]
  %s2 = inlined_call_operand.hbm [shape: bf16[256,256], index: 2, kind: input, shape index: {}]
  %s3 = inlined_call_operand.hbm [shape: f32[8,256], index: 3, kind: input, shape index: {}]
  %s4 = inlined_call_operand.hbm [shape: f32[256,256], index: 4, kind: output, shape index: {}]
  %s5 = sld [smem:[#allocation0]]
  $region65: #{tpu_custom_call.1} parent=0
    _
  %s7 = ssub.s32 1, %s5
  %s8 = scalar_select 0, %s7, %s5
  $region1: #{tpu_custom_call.1} parent=0
    #allocation2 [shape = 'u8[262144]{0}', space=vmem, size = 0x40000, scoped, tag = 'input window, operand 0']
    #allocation3 [shape = 's32[2]{0}', space=sflag, size = 0x8, scoped, tag = 'scoped memory for tpu_custom_call.1']
    #allocation4 [shape = 's32[2]{0}', space=sflag, size = 0x8, scoped, tag = 'scoped memory for tpu_custom_call.1']
    #allocation5 [shape = 'u8[262144]{0}', space=vmem, size = 0x40000, scoped, tag = 'input window, operand 1, single buffered']
    #allocation6 [shape = 's32[1]{0}', space=sflag, size = 0x4, scoped, tag = 'scoped memory for tpu_custom_call.1']
    #allocation7 [shape = 'u8[131072]{0}', space=vmem, size = 0x20000, scoped, tag = 'input window, operand 2, single buffered']
    #allocation8 [shape = 'u8[8192]{0}', space=vmem, size = 0x2000, scoped, tag = 'input window, operand 3, single buffered']
    #allocation9 [shape = 's32[1]{0}', space=sflag, size = 0x4, scoped, tag = 'scoped memory for tpu_custom_call.1']
    #allocation10 [shape = 'u8[262144]{0}', space=vmem, size = 0x40000, scoped, tag = 'output window, operand 0']
    %9 = vsyncpa [#allocation3], 0
    %s10 = scalar_lea.sflag [#allocation3], 1
    %11 = vsyncpa %s10, 0
    %12 = vsyncpa [#allocation6], 0
    %13 = vsyncpa [#allocation9], 0
    %14 = vsyncpa [#allocation4], 0
    %s15 = scalar_lea.sflag [#allocation4], 1
    %16 = vsyncpa %s15, 0
    loop: start=0, step=1, limit=4
    $region2: #{tpu_custom_call.1} parent=1 // loop_pre_header
      _
    $region3: #{tpu_custom_call.1} parent=1 // loop_header
      %s18 = sphi 0, %s22
      %p19 = scmp.ge.s32.totalorder %s18, 4
      %s28 = sphi 0, %s30
      %s31 = sphi 0, %s28
      %s32 = sphi 0, %s31
      %s48 = sphi 0, %s32
      %s52 = sphi 0, %s52
      %s54 = sphi 0, %s52
      %s55 = sphi 0, %s54
      %s69 = sphi 0, %s55
      %s73 = sphi 0, %s73
      %s75 = sphi 0, %s73
      %s76 = sphi 0, %s75
      %s90 = sphi 0, %s76
      %s94 = sphi 0, %s94
      %s96 = sphi 0, %s94
      %s97 = sphi 0, %s96
      %s111 = sphi 0, %s97
      %s117 = sphi 0, %s119
      %s120 = sphi 0, %s117
      %s121 = sphi 0, %s120
      %s137 = sphi 0, %s121
    $region4: #{tpu_custom_call.1} parent=1 // loop_header_branch
      %21 = sbr.rel (%p19) target = $region8
    $region5: #{tpu_custom_call.1} parent=1 // loop_body
      %s23 = ssub.s32 %s18, 1
      %s24 = ssub.s32 %s18, 2
      %s25 = sadd.s32 %s18, 1
      %s26 = ssub.s32 %s18, %s25
      %p27 = scmp.eq.s32.totalorder %s26, 0
      %s29 = sadd.s32 %s28, 1
      %s30 = scalar_select %p27, %s28, %s29
      %p33 = pneg %p27
      %p34 = scmp.eq.s32.totalorder %s18, 1
      %p35 = por %p33, %p34
      %p36 = scmp.ne.s32.totalorder %s28, %s31
      %p37 = scmp.eq.s32.totalorder %s18, 0
      %p38 = por %p36, %p37
      %p39 = scmp.ne.s32.totalorder %s28, %s31
      %p40 = scmp.eq.s32.totalorder %s23, 1
      %p41 = por %p39, %p40
      %p42 = scmp.ne.s32.totalorder %s31, %s32
      %p43 = scmp.eq.s32.totalorder %s23, 0
      %p44 = por %p42, %p43
      %p45 = scmp.ne.s32.totalorder %s31, %s32
      %p46 = scmp.eq.s32.totalorder %s24, 1
      %p47 = por %p45, %p46
      %p49 = scmp.ne.s32.totalorder %s32, %s48
      %p50 = scmp.eq.s32.totalorder %s24, 0
      %p51 = por %p49, %p50
      %s53 = sadd.s32 %s52, 1
      %p56 = scmp.eq.s32.totalorder %s18, 1
      %p57 = scmp.ne.s32.totalorder %s52, %s54
      %p58 = scmp.eq.s32.totalorder %s18, 0
      %p59 = por %p57, %p58
      %p60 = scmp.ne.s32.totalorder %s52, %s54
      %p61 = scmp.eq.s32.totalorder %s23, 1
      %p62 = por %p60, %p61
      %p63 = scmp.ne.s32.totalorder %s54, %s55
      %p64 = scmp.eq.s32.totalorder %s23, 0
      %p65 = por %p63, %p64
      %p66 = scmp.ne.s32.totalorder %s54, %s55
      %p67 = scmp.eq.s32.totalorder %s24, 1
      %p68 = por %p66, %p67
      %p70 = scmp.ne.s32.totalorder %s55, %s69
      %p71 = scmp.eq.s32.totalorder %s24, 0
      %p72 = por %p70, %p71
      %s74 = sadd.s32 %s73, 1
      %p77 = scmp.eq.s32.totalorder %s18, 1
      %p78 = scmp.ne.s32.totalorder %s73, %s75
      %p79 = scmp.eq.s32.totalorder %s18, 0
      %p80 = por %p78, %p79
      %p81 = scmp.ne.s32.totalorder %s73, %s75
      %p82 = scmp.eq.s32.totalorder %s23, 1
      %p83 = por %p81, %p82
      %p84 = scmp.ne.s32.totalorder %s75, %s76
      %p85 = scmp.eq.s32.totalorder %s23, 0
      %p86 = por %p84, %p85
      %p87 = scmp.ne.s32.totalorder %s75, %s76
      %p88 = scmp.eq.s32.totalorder %s24, 1
      %p89 = por %p87, %p88
      %p91 = scmp.ne.s32.totalorder %s76, %s90
      %p92 = scmp.eq.s32.totalorder %s24, 0
      %p93 = por %p91, %p92
      %s95 = sadd.s32 %s94, 1
      %p98 = scmp.eq.s32.totalorder %s18, 1
      %p99 = scmp.ne.s32.totalorder %s94, %s96
      %p100 = scmp.eq.s32.totalorder %s18, 0
      %p101 = por %p99, %p100
      %p102 = scmp.ne.s32.totalorder %s94, %s96
      %p103 = scmp.eq.s32.totalorder %s23, 1
      %p104 = por %p102, %p103
      %p105 = scmp.ne.s32.totalorder %s96, %s97
      %p106 = scmp.eq.s32.totalorder %s23, 0
      %p107 = por %p105, %p106
      %p108 = scmp.ne.s32.totalorder %s96, %s97
      %p109 = scmp.eq.s32.totalorder %s24, 1
      %p110 = por %p108, %p109
      %p112 = scmp.ne.s32.totalorder %s97, %s111
      %p113 = scmp.eq.s32.totalorder %s24, 0
      %p114 = por %p112, %p113
      %s115 = ssub.s32 %s18, %s25
      %p116 = scmp.eq.s32.totalorder %s115, 0
      %s118 = sadd.s32 %s117, 1
      %s119 = scalar_select %p116, %s117, %s118
      %p122 = pneg %p116
      %p123 = scmp.eq.s32.totalorder %s18, 1
      %p124 = por %p122, %p123
      %p125 = scmp.ne.s32.totalorder %s117, %s120
      %p126 = scmp.eq.s32.totalorder %s18, 0
      %p127 = por %p125, %p126
      %p128 = scmp.ne.s32.totalorder %s117, %s120
      %p129 = scmp.eq.s32.totalorder %s23, 1
      %p130 = por %p128, %p129
      %p131 = scmp.ne.s32.totalorder %s120, %s121
      %p132 = scmp.eq.s32.totalorder %s23, 0
      %p133 = por %p131, %p132
      %p134 = scmp.ne.s32.totalorder %s120, %s121
      %p135 = scmp.eq.s32.totalorder %s24, 1
      %p136 = por %p134, %p135
      %p138 = scmp.ne.s32.totalorder %s121, %s137
      %p139 = scmp.eq.s32.totalorder %s24, 0
      %p140 = por %p138, %p139
      %p141 = scmp.le.s32.totalorder 1, %s18
      %p142 = scmp.lt.s32.totalorder %s18, 3
      %p143 = pnand %p141, %p142
      %p144 = pneg %p143
      // Predicated region
      $region9: #{tpu_custom_call.1} parent=5 // pred_check
        _
      $region10: #{tpu_custom_call.1} parent=5 // pred_check_branch
        %146 = sbr.rel (%p143) target = $region12
      $region11: #{tpu_custom_call.1} parent=5 // pred_region
        %s147 = ssub.s32 %s18, 1
        // Predicated region
        $region13: #{tpu_custom_call.1} parent=11 // pred_check
          %p148 = pneg %p65
        $region14: #{tpu_custom_call.1} parent=11 // pred_check_branch
          %150 = sbr.rel (%p148) target = $region16
        $region15: #{tpu_custom_call.1} parent=11 // pred_region
          %152 = vsyncadd [#allocation6], 0
          %s153 = sshll.u32 %s1, 4
          %s154 = int_to_ptr.hbm [resolvable:$true] %s153
          %s155 = sshll.u32 [#allocation5], 4
          %s156 = int_to_ptr.vmem [resolvable:$true] %s155
          %161 = dma.hbm_to_vmem [thread:$0]  %s154, 8192, %s156, [#allocation6], 128, 128, 8
        $region16: #{tpu_custom_call.1} parent=11 // pred_fallthru
          _
        // Predicated region
        $region17: #{tpu_custom_call.1} parent=11 // pred_check
          %p162 = pneg %p86
        $region18: #{tpu_custom_call.1} parent=11 // pred_check_branch
          %164 = sbr.rel (%p162) target = $region20
        $region19: #{tpu_custom_call.1} parent=11 // pred_region
          %166 = vsyncadd [#allocation6], 0
          %s167 = sshll.u32 %s2, 4
          %s168 = int_to_ptr.hbm [resolvable:$true] %s167
          %s169 = sshll.u32 [#allocation7], 4
          %s170 = int_to_ptr.vmem [resolvable:$true] %s169
          %175 = dma.hbm_to_vmem [thread:$0]  %s168, 4096, %s170, [#allocation6], 128, 128, 8
        $region20: #{tpu_custom_call.1} parent=11 // pred_fallthru
          _
        // Predicated region
        $region21: #{tpu_custom_call.1} parent=11 // pred_check
          %p176 = pneg %p107
        $region22: #{tpu_custom_call.1} parent=11 // pred_check_branch
          %178 = sbr.rel (%p176) target = $region24
        $region23: #{tpu_custom_call.1} parent=11 // pred_region
          %180 = vsyncadd [#allocation9], 0
          %s182 = sshll.u32 %s3, 4
          %s183 = int_to_ptr.hbm [resolvable:$true] %s182
          %s184 = sshll.u32 [#allocation8], 4
          %s185 = int_to_ptr.vmem [resolvable:$true] %s184
          %187 = dma.hbm_to_vmem [thread:$0]  %s183, 256, %s185, [#allocation9]
        $region24: #{tpu_custom_call.1} parent=11 // pred_fallthru
          _
      $region12: #{tpu_custom_call.1} parent=5 // pred_fallthru
        _
      %p188 = scmp.lt.s32.totalorder %s18, 2
      // Predicated region
      $region25: #{tpu_custom_call.1} parent=5 // pred_check
        %p189 = pneg %p188
      $region26: #{tpu_custom_call.1} parent=5 // pred_check_branch
        %191 = sbr.rel (%p189) target = $region28
      $region27: #{tpu_custom_call.1} parent=5 // pred_region
        // Predicated region
        $region29: #{tpu_custom_call.1} parent=27 // pred_check
          %p192 = pneg %p38
        $region30: #{tpu_custom_call.1} parent=27 // pred_check_branch
          %194 = sbr.rel (%p192) target = $region32
        $region31: #{tpu_custom_call.1} parent=27 // pred_region
          %s195 = sand.u32 %s28, 1
          %s196 = scalar_lea.sflag [#allocation3], %s195
          %s197 = sand.u32 %s28, 1
          %s198 = smul.addr %s197, 256
          %s199 = scalar_lea.vmem [#allocation2], %s198
          %s200 = smul.u32 16, %s18
          %202 = vsyncadd %s196, 0
          %s203 = smul.addr %s200, 4
          %s204 = smul.addr %s203, 4
          %s205 = scalar_lea.hbm %s0, %s204
          %s206 = sshll.u32 %s205, 4
          %s207 = int_to_ptr.hbm [resolvable:$true] %s206
          %s208 = sshll.u32 %s199, 4
          %s209 = int_to_ptr.vmem [resolvable:$true] %s208
          %214 = dma.hbm_to_vmem [thread:$0]  %s207, 4096, %s209, %s196, 256, 256, 16
        $region32: #{tpu_custom_call.1} parent=27 // pred_fallthru
          _
      $region28: #{tpu_custom_call.1} parent=5 // pred_fallthru
        _
      %p215 = scmp.le.s32.totalorder 1, %s18
      %p216 = scmp.lt.s32.totalorder %s18, 3
      %p217 = pnand %p215, %p216
      %p218 = pneg %p217
      // Predicated region
      $region33: #{tpu_custom_call.1} parent=5 // pred_check
        _
      $region34: #{tpu_custom_call.1} parent=5 // pred_check_branch
        %220 = sbr.rel (%p217) target = $region36
      $region35: #{tpu_custom_call.1} parent=5 // pred_region
        %s221 = ssub.s32 %s18, 1
        %s222 = sand.u32 %s31, 1
        %s223 = scalar_lea.sflag [#allocation3], %s222
        %s224 = sand.u32 %s31, 1
        %s225 = smul.addr %s224, 256
        %s226 = scalar_lea.vmem [#allocation2], %s225
        // Predicated region
        $region37: #{tpu_custom_call.1} parent=35 // pred_check
          %p227 = pneg %p44
        $region38: #{tpu_custom_call.1} parent=35 // pred_check_branch
          %229 = sbr.rel (%p227) target = $region40
        $region39: #{tpu_custom_call.1} parent=35 // pred_region
          %231 = dma.done %s223, 4096
        $region40: #{tpu_custom_call.1} parent=35 // pred_fallthru
          _
        // Predicated region
        $region41: #{tpu_custom_call.1} parent=35 // pred_check
          %p232 = pneg %p65
        $region42: #{tpu_custom_call.1} parent=35 // pred_check_branch
          %234 = sbr.rel (%p232) target = $region44
        $region43: #{tpu_custom_call.1} parent=35 // pred_region
          %236 = dma.done [#allocation6], 8192
        $region44: #{tpu_custom_call.1} parent=35 // pred_fallthru
          _
        // Predicated region
        $region45: #{tpu_custom_call.1} parent=35 // pred_check
          %p237 = pneg %p86
        $region46: #{tpu_custom_call.1} parent=35 // pred_check_branch
          %239 = sbr.rel (%p237) target = $region48
        $region47: #{tpu_custom_call.1} parent=35 // pred_region
          %241 = dma.done [#allocation6], 4096
        $region48: #{tpu_custom_call.1} parent=35 // pred_fallthru
          _
        // Predicated region
        $region49: #{tpu_custom_call.1} parent=35 // pred_check
          %p242 = pneg %p107
        $region50: #{tpu_custom_call.1} parent=35 // pred_check_branch
          %244 = sbr.rel (%p242) target = $region52
        $region51: #{tpu_custom_call.1} parent=35 // pred_region
          %246 = dma.done [#allocation9], 256
        $region52: #{tpu_custom_call.1} parent=35 // pred_fallthru
          _
        %s247 = sand.u32 %s31, 1
        %s248 = scalar_lea.sflag [#allocation3], %s247
        %s249 = sand.u32 %s31, 1
        %s250 = smul.addr %s249, 256
        %s251 = scalar_lea.vmem [#allocation2], %s250
        %p252 = pneg %p44
        %p253 = pneg %p41
        %p254 = pneg %p65
        %p255 = pneg %p62
        %p256 = pneg %p86
        %p257 = pneg %p83
        %p258 = pneg %p107
        %p259 = pneg %p104
        %p260 = pneg %p133
        %p261 = pneg %p130
        %s262 = sand.u32 %s120, 1
        %s263 = scalar_lea.sflag [#allocation4], %s262
        %s264 = sand.u32 %s120, 1
        %s265 = smul.addr %s264, 256
        %s266 = scalar_lea.vmem [#allocation10], %s265
        %s267 = smul.u32 16, %s23
        %s268 = smul.u32 16, %s23
        %v269 = vld [vmem:[%s226] sm:$0xff]
        %v270 = vld [vmem:[%s226 + $0x8] sm:$0xff]
        %v271 = vld [vmem:[%s226 + $0x10] sm:$0xff]
        %v272 = vld [vmem:[%s226 + $0x18] sm:$0xff]
        %v273 = vld [vmem:[%s226 + $0x20] sm:$0xff]
        %v274 = vld [vmem:[%s226 + $0x28] sm:$0xff]
        %v275 = vld [vmem:[%s226 + $0x30] sm:$0xff]
        %v276 = vld [vmem:[%s226 + $0x38] sm:$0xff]
        %v277 = vld [vmem:[%s226 + $0x40] sm:$0xff]
        %v278 = vld [vmem:[%s226 + $0x48] sm:$0xff]
        %v279 = vld [vmem:[%s226 + $0x50] sm:$0xff]
        %v280 = vld [vmem:[%s226 + $0x58] sm:$0xff]
        %v281 = vld [vmem:[%s226 + $0x60] sm:$0xff]
        %v282 = vld [vmem:[%s226 + $0x68] sm:$0xff]
        %v283 = vld [vmem:[%s226 + $0x70] sm:$0xff]
        %v284 = vld [vmem:[%s226 + $0x78] sm:$0xff]
        %v285 = vld [vmem:[%s226 + $0x80] sm:$0xff]
        %v286 = vld [vmem:[%s226 + $0x88] sm:$0xff]
        %v287 = vld [vmem:[%s226 + $0x90] sm:$0xff]
        %v288 = vld [vmem:[%s226 + $0x98] sm:$0xff]
        %v289 = vld [vmem:[%s226 + $0xa0] sm:$0xff]
        %v290 = vld [vmem:[%s226 + $0xa8] sm:$0xff]
        %v291 = vld [vmem:[%s226 + $0xb0] sm:$0xff]
        %v292 = vld [vmem:[%s226 + $0xb8] sm:$0xff]
        %v293 = vld [vmem:[%s226 + $0xc0] sm:$0xff]
        %v294 = vld [vmem:[%s226 + $0xc8] sm:$0xff]
        %v295 = vld [vmem:[%s226 + $0xd0] sm:$0xff]
        %v296 = vld [vmem:[%s226 + $0xd8] sm:$0xff]
        %v297 = vld [vmem:[%s226 + $0xe0] sm:$0xff]
        %v298 = vld [vmem:[%s226 + $0xe8] sm:$0xff]
        %v299 = vld [vmem:[%s226 + $0xf0] sm:$0xff]
        %v300 = vld [vmem:[%s226 + $0xf8] sm:$0xff]
        %v301 = vld [vmem:[#allocation8] ss:$8 sm:$0x3]
        %s302 = scalar_lea.vmem [#allocation8], 1
        %v303 = vld [vmem:[%s302] ss:$8 sm:$0x3]
        %s304 = scalar_lea.vmem [#allocation8], 2
        %v305 = vld [vmem:[%s304] ss:$8 sm:$0x3]
        %s306 = scalar_lea.vmem [#allocation8], 3
        %v307 = vld [vmem:[%s306] ss:$8 sm:$0x3]
        %v308 = vld [vmem:[#allocation5] sm:$0xff]
        %v309 = vld [vmem:[#allocation5 + $0x8] sm:$0xff]
        %v310 = vld [vmem:[#allocation5 + $0x10] sm:$0xff]
        %v311 = vld [vmem:[#allocation5 + $0x18] sm:$0xff]
        %v312 = vld [vmem:[#allocation5 + $0x20] sm:$0xff]
        %v313 = vld [vmem:[#allocation5 + $0x28] sm:$0xff]
        %v314 = vld [vmem:[#allocation5 + $0x30] sm:$0xff]
        %v315 = vld [vmem:[#allocation5 + $0x38] sm:$0xff]
        %v316 = vld [vmem:[#allocation5 + $0x40] sm:$0xff]
        %v317 = vld [vmem:[#allocation5 + $0x48] sm:$0xff]
        %v318 = vld [vmem:[#allocation5 + $0x50] sm:$0xff]
        %v319 = vld [vmem:[#allocation5 + $0x58] sm:$0xff]
        %v320 = vld [vmem:[#allocation5 + $0x60] sm:$0xff]
        %v321 = vld [vmem:[#allocation5 + $0x68] sm:$0xff]
        %v322 = vld [vmem:[#allocation5 + $0x70] sm:$0xff]
        %v323 = vld [vmem:[#allocation5 + $0x78] sm:$0xff]
        %v324 = vld [vmem:[#allocation5 + $0x80] sm:$0xff]
        %v325 = vld [vmem:[#allocation5 + $0x88] sm:$0xff]
        %v326 = vld [vmem:[#allocation5 + $0x90] sm:$0xff]
        %v327 = vld [vmem:[#allocation5 + $0x98] sm:$0xff]
        %v328 = vld [vmem:[#allocation5 + $0xa0] sm:$0xff]
        %v329 = vld [vmem:[#allocation5 + $0xa8] sm:$0xff]
        %v330 = vld [vmem:[#allocation5 + $0xb0] sm:$0xff]
        %v331 = vld [vmem:[#allocation5 + $0xb8] sm:$0xff]
        %v332 = vld [vmem:[#allocation5 + $0xc0] sm:$0xff]
        %v333 = vld [vmem:[#allocation5 + $0xc8] sm:$0xff]
        %v334 = vld [vmem:[#allocation5 + $0xd0] sm:$0xff]
        %v335 = vld [vmem:[#allocation5 + $0xd8] sm:$0xff]
        %v336 = vld [vmem:[#allocation5 + $0xe0] sm:$0xff]
        %v337 = vld [vmem:[#allocation5 + $0xe8] sm:$0xff]
        %v338 = vld [vmem:[#allocation5 + $0xf0] sm:$0xff]
        %v339 = vld [vmem:[#allocation5 + $0xf8] sm:$0xff]
        %v340 = vld [vmem:[#allocation5 + $0x100] sm:$0xff]
        %v341 = vld [vmem:[#allocation5 + $0x108] sm:$0xff]
        %v342 = vld [vmem:[#allocation5 + $0x110] sm:$0xff]
        %v343 = vld [vmem:[#allocation5 + $0x118] sm:$0xff]
        %v344 = vld [vmem:[#allocation5 + $0x120] sm:$0xff]
        %v345 = vld [vmem:[#allocation5 + $0x128] sm:$0xff]
        %v346 = vld [vmem:[#allocation5 + $0x130] sm:$0xff]
        %v347 = vld [vmem:[#allocation5 + $0x138] sm:$0xff]
        %v348 = vld [vmem:[#allocation5 + $0x140] sm:$0xff]
        %v349 = vld [vmem:[#allocation5 + $0x148] sm:$0xff]
        %v350 = vld [vmem:[#allocation5 + $0x150] sm:$0xff]
        %v351 = vld [vmem:[#allocation5 + $0x158] sm:$0xff]
        %v352 = vld [vmem:[#allocation5 + $0x160] sm:$0xff]
        %v353 = vld [vmem:[#allocation5 + $0x168] sm:$0xff]
        %v354 = vld [vmem:[#allocation5 + $0x170] sm:$0xff]
        %v355 = vld [vmem:[#allocation5 + $0x178] sm:$0xff]
        %v356 = vld [vmem:[#allocation5 + $0x180] sm:$0xff]
        %v357 = vld [vmem:[#allocation5 + $0x188] sm:$0xff]
        %v358 = vld [vmem:[#allocation5 + $0x190] sm:$0xff]
        %v359 = vld [vmem:[#allocation5 + $0x198] sm:$0xff]
        %v360 = vld [vmem:[#allocation5 + $0x1a0] sm:$0xff]
        %v361 = vld [vmem:[#allocation5 + $0x1a8] sm:$0xff]
        %v362 = vld [vmem:[#allocation5 + $0x1b0] sm:$0xff]
        %v363 = vld [vmem:[#allocation5 + $0x1b8] sm:$0xff]
        %v364 = vld [vmem:[#allocation5 + $0x1c0] sm:$0xff]
        %v365 = vld [vmem:[#allocation5 + $0x1c8] sm:$0xff]
        %v366 = vld [vmem:[#allocation5 + $0x1d0] sm:$0xff]
        %v367 = vld [vmem:[#allocation5 + $0x1d8] sm:$0xff]
        %v368 = vld [vmem:[#allocation5 + $0x1e0] sm:$0xff]
        %v369 = vld [vmem:[#allocation5 + $0x1e8] sm:$0xff]
        %v370 = vld [vmem:[#allocation5 + $0x1f0] sm:$0xff]
        %v371 = vld [vmem:[#allocation5 + $0x1f8] sm:$0xff]
        %v373 = vperm.slane %v301, 0
        %v374 = vperm.slane %v301, 1
        %v409 = vunpack.c.l.b16 %v269
        %v410 = vunpack.c.h.b16 %v269
        %v411 = vunpack.c.l.b16 %v270
        %v412 = vunpack.c.h.b16 %v270
        %v413 = vunpack.c.l.b16 %v271
        %v414 = vunpack.c.h.b16 %v271
        %v415 = vunpack.c.l.b16 %v272
        %v416 = vunpack.c.h.b16 %v272
        %v417 = vunpack.c.l.b16 %v273
        %v418 = vunpack.c.h.b16 %v273
        %v419 = vunpack.c.l.b16 %v274
        %v420 = vunpack.c.h.b16 %v274
        %v421 = vunpack.c.l.b16 %v275
        %v422 = vunpack.c.h.b16 %v275
        %v423 = vunpack.c.l.b16 %v276
        %v424 = vunpack.c.h.b16 %v276
        %v425 = vunpack.c.l.b16 %v277
        %v426 = vunpack.c.h.b16 %v277
        %v427 = vunpack.c.l.b16 %v278
        %v428 = vunpack.c.h.b16 %v278
        %v429 = vunpack.c.l.b16 %v279
        %v430 = vunpack.c.h.b16 %v279
        %v431 = vunpack.c.l.b16 %v280
        %v432 = vunpack.c.h.b16 %v280
        %v433 = vunpack.c.l.b16 %v281
        %v434 = vunpack.c.h.b16 %v281
        %v435 = vunpack.c.l.b16 %v282
        %v436 = vunpack.c.h.b16 %v282
        %v437 = vunpack.c.l.b16 %v283
        %v438 = vunpack.c.h.b16 %v283
        %v439 = vunpack.c.l.b16 %v284
        %v440 = vunpack.c.h.b16 %v284
        %v441 = vunpack.c.l.b16 %v285
        %v442 = vunpack.c.h.b16 %v285
        %v443 = vunpack.c.l.b16 %v286
        %v444 = vunpack.c.h.b16 %v286
        %v445 = vunpack.c.l.b16 %v287
        %v446 = vunpack.c.h.b16 %v287
        %v447 = vunpack.c.l.b16 %v288
        %v448 = vunpack.c.h.b16 %v288
        %v449 = vunpack.c.l.b16 %v289
        %v450 = vunpack.c.h.b16 %v289
        %v451 = vunpack.c.l.b16 %v290
        %v452 = vunpack.c.h.b16 %v290
        %v453 = vunpack.c.l.b16 %v291
        %v454 = vunpack.c.h.b16 %v291
        %v455 = vunpack.c.l.b16 %v292
        %v456 = vunpack.c.h.b16 %v292
        %v457 = vunpack.c.l.b16 %v293
        %v458 = vunpack.c.h.b16 %v293
        %v459 = vunpack.c.l.b16 %v294
        %v460 = vunpack.c.h.b16 %v294
        %v461 = vunpack.c.l.b16 %v295
        %v462 = vunpack.c.h.b16 %v295
        %v463 = vunpack.c.l.b16 %v296
        %v464 = vunpack.c.h.b16 %v296
        %v465 = vunpack.c.l.b16 %v297
        %v466 = vunpack.c.h.b16 %v297
        %v467 = vunpack.c.l.b16 %v298
        %v468 = vunpack.c.h.b16 %v298
        %v469 = vunpack.c.l.b16 %v299
        %v470 = vunpack.c.h.b16 %v299
        %v471 = vunpack.c.l.b16 %v300
        %v472 = vunpack.c.h.b16 %v300
        %v473 = vpack.c.b16 %v413, %v409
        %v474 = vpack.c.b16 %v414, %v410
        %v475 = vpack.c.b16 %v415, %v411
        %v476 = vpack.c.b16 %v416, %v412
        %v477 = vpack.c.b16 %v421, %v417
        %v478 = vpack.c.b16 %v422, %v418
        %v479 = vpack.c.b16 %v423, %v419
        %v480 = vpack.c.b16 %v424, %v420
        %v481 = vpack.c.b16 %v429, %v425
        %v482 = vpack.c.b16 %v430, %v426
        %v483 = vpack.c.b16 %v431, %v427
        %v484 = vpack.c.b16 %v432, %v428
        %v485 = vpack.c.b16 %v437, %v433
        %v486 = vpack.c.b16 %v438, %v434
        %v487 = vpack.c.b16 %v439, %v435
        %v488 = vpack.c.b16 %v440, %v436
        %v489 = vpack.c.b16 %v445, %v441
        %v490 = vpack.c.b16 %v446, %v442
        %v491 = vpack.c.b16 %v447, %v443
        %v492 = vpack.c.b16 %v448, %v444
        %v493 = vpack.c.b16 %v453, %v449
        %v494 = vpack.c.b16 %v454, %v450
        %v495 = vpack.c.b16 %v455, %v451
        %v496 = vpack.c.b16 %v456, %v452
        %v497 = vpack.c.b16 %v461, %v457
        %v498 = vpack.c.b16 %v462, %v458
        %v499 = vpack.c.b16 %v463, %v459
        %v500 = vpack.c.b16 %v464, %v460
        %v501 = vpack.c.b16 %v469, %v465
        %v502 = vpack.c.b16 %v470, %v466
        %v503 = vpack.c.b16 %v471, %v467
        %v504 = vpack.c.b16 %v472, %v468
        %v601 = vunpack.c.l.b16 %v308
        %v602 = vunpack.c.h.b16 %v308
        %v603 = vunpack.c.l.b16 %v309
        %v604 = vunpack.c.h.b16 %v309
        %v605 = vunpack.c.l.b16 %v310
        %v606 = vunpack.c.h.b16 %v310
        %v607 = vunpack.c.l.b16 %v311
        %v608 = vunpack.c.h.b16 %v311
        %v609 = vunpack.c.l.b16 %v312
        %v610 = vunpack.c.h.b16 %v312
        %v611 = vunpack.c.l.b16 %v313
        %v612 = vunpack.c.h.b16 %v313
        %v613 = vunpack.c.l.b16 %v314
        %v614 = vunpack.c.h.b16 %v314
        %v615 = vunpack.c.l.b16 %v315
        %v616 = vunpack.c.h.b16 %v315
        %v617 = vunpack.c.l.b16 %v316
        %v618 = vunpack.c.h.b16 %v316
        %v619 = vunpack.c.l.b16 %v317
        %v620 = vunpack.c.h.b16 %v317
        %v621 = vunpack.c.l.b16 %v318
        %v622 = vunpack.c.h.b16 %v318
        %v623 = vunpack.c.l.b16 %v319
        %v624 = vunpack.c.h.b16 %v319
        %v625 = vunpack.c.l.b16 %v320
        %v626 = vunpack.c.h.b16 %v320
        %v627 = vunpack.c.l.b16 %v321
        %v628 = vunpack.c.h.b16 %v321
        %v629 = vunpack.c.l.b16 %v322
        %v630 = vunpack.c.h.b16 %v322
        %v631 = vunpack.c.l.b16 %v323
        %v632 = vunpack.c.h.b16 %v323
        %v633 = vunpack.c.l.b16 %v324
        %v634 = vunpack.c.h.b16 %v324
        %v635 = vunpack.c.l.b16 %v325
        %v636 = vunpack.c.h.b16 %v325
        %v637 = vunpack.c.l.b16 %v326
        %v638 = vunpack.c.h.b16 %v326
        %v639 = vunpack.c.l.b16 %v327
        %v640 = vunpack.c.h.b16 %v327
        %v641 = vunpack.c.l.b16 %v328
        %v642 = vunpack.c.h.b16 %v328
        %v643 = vunpack.c.l.b16 %v329
        %v644 = vunpack.c.h.b16 %v329
        %v645 = vunpack.c.l.b16 %v330
        %v646 = vunpack.c.h.b16 %v330
        %v647 = vunpack.c.l.b16 %v331
        %v648 = vunpack.c.h.b16 %v331
        %v649 = vunpack.c.l.b16 %v332
        %v650 = vunpack.c.h.b16 %v332
        %v651 = vunpack.c.l.b16 %v333
        %v652 = vunpack.c.h.b16 %v333
        %v653 = vunpack.c.l.b16 %v334
        %v654 = vunpack.c.h.b16 %v334
        %v655 = vunpack.c.l.b16 %v335
        %v656 = vunpack.c.h.b16 %v335
        %v657 = vunpack.c.l.b16 %v336
        %v658 = vunpack.c.h.b16 %v336
        %v659 = vunpack.c.l.b16 %v337
        %v660 = vunpack.c.h.b16 %v337
        %v661 = vunpack.c.l.b16 %v338
        %v662 = vunpack.c.h.b16 %v338
        %v663 = vunpack.c.l.b16 %v339
        %v664 = vunpack.c.h.b16 %v339
        %v665 = vunpack.c.l.b16 %v340
        %v666 = vunpack.c.h.b16 %v340
        %v667 = vunpack.c.l.b16 %v341
        %v668 = vunpack.c.h.b16 %v341
        %v669 = vunpack.c.l.b16 %v342
        %v670 = vunpack.c.h.b16 %v342
        %v671 = vunpack.c.l.b16 %v343
        %v672 = vunpack.c.h.b16 %v343
        %v673 = vunpack.c.l.b16 %v344
        %v674 = vunpack.c.h.b16 %v344
        %v675 = vunpack.c.l.b16 %v345
        %v676 = vunpack.c.h.b16 %v345
        %v677 = vunpack.c.l.b16 %v346
        %v678 = vunpack.c.h.b16 %v346
        %v679 = vunpack.c.l.b16 %v347
        %v680 = vunpack.c.h.b16 %v347
        %v681 = vunpack.c.l.b16 %v348
        %v682 = vunpack.c.h.b16 %v348
        %v683 = vunpack.c.l.b16 %v349
        %v684 = vunpack.c.h.b16 %v349
        %v685 = vunpack.c.l.b16 %v350
        %v686 = vunpack.c.h.b16 %v350
        %v687 = vunpack.c.l.b16 %v351
        %v688 = vunpack.c.h.b16 %v351
        %v689 = vunpack.c.l.b16 %v352
        %v690 = vunpack.c.h.b16 %v352
        %v691 = vunpack.c.l.b16 %v353
        %v692 = vunpack.c.h.b16 %v353
        %v693 = vunpack.c.l.b16 %v354
        %v694 = vunpack.c.h.b16 %v354
        %v695 = vunpack.c.l.b16 %v355
        %v696 = vunpack.c.h.b16 %v355
        %v697 = vunpack.c.l.b16 %v356
        %v698 = vunpack.c.h.b16 %v356
        %v699 = vunpack.c.l.b16 %v357
        %v700 = vunpack.c.h.b16 %v357
        %v701 = vunpack.c.l.b16 %v358
        %v702 = vunpack.c.h.b16 %v358
        %v703 = vunpack.c.l.b16 %v359
        %v704 = vunpack.c.h.b16 %v359
        %v705 = vunpack.c.l.b16 %v360
        %v706 = vunpack.c.h.b16 %v360
        %v707 = vunpack.c.l.b16 %v361
        %v708 = vunpack.c.h.b16 %v361
        %v709 = vunpack.c.l.b16 %v362
        %v710 = vunpack.c.h.b16 %v362
        %v711 = vunpack.c.l.b16 %v363
        %v712 = vunpack.c.h.b16 %v363
        %v713 = vunpack.c.l.b16 %v364
        %v714 = vunpack.c.h.b16 %v364
        %v715 = vunpack.c.l.b16 %v365
        %v716 = vunpack.c.h.b16 %v365
        %v717 = vunpack.c.l.b16 %v366
        %v718 = vunpack.c.h.b16 %v366
        %v719 = vunpack.c.l.b16 %v367
        %v720 = vunpack.c.h.b16 %v367
        %v721 = vunpack.c.l.b16 %v368
        %v722 = vunpack.c.h.b16 %v368
        %v723 = vunpack.c.l.b16 %v369
        %v724 = vunpack.c.h.b16 %v369
        %v725 = vunpack.c.l.b16 %v370
        %v726 = vunpack.c.h.b16 %v370
        %v727 = vunpack.c.l.b16 %v371
        %v728 = vunpack.c.h.b16 %v371
        %v729 = vpack.c.b16 %v603, %v601
        %v730 = vpack.c.b16 %v604, %v602
        %v731 = vpack.c.b16 %v607, %v605
        %v732 = vpack.c.b16 %v608, %v606
        %v733 = vpack.c.b16 %v611, %v609
        %v734 = vpack.c.b16 %v612, %v610
        %v735 = vpack.c.b16 %v615, %v613
        %v736 = vpack.c.b16 %v616, %v614
        %v737 = vpack.c.b16 %v619, %v617
        %v738 = vpack.c.b16 %v620, %v618
        %v739 = vpack.c.b16 %v623, %v621
        %v740 = vpack.c.b16 %v624, %v622
        %v741 = vpack.c.b16 %v627, %v625
        %v742 = vpack.c.b16 %v628, %v626
        %v743 = vpack.c.b16 %v631, %v629
        %v744 = vpack.c.b16 %v632, %v630
        %v745 = vpack.c.b16 %v635, %v633
        %v746 = vpack.c.b16 %v636, %v634
        %v747 = vpack.c.b16 %v639, %v637
        %v748 = vpack.c.b16 %v640, %v638
        %v749 = vpack.c.b16 %v643, %v641
        %v750 = vpack.c.b16 %v644, %v642
        %v751 = vpack.c.b16 %v647, %v645
        %v752 = vpack.c.b16 %v648, %v646
        %v753 = vpack.c.b16 %v651, %v649
        %v754 = vpack.c.b16 %v652, %v650
        %v755 = vpack.c.b16 %v655, %v653
        %v756 = vpack.c.b16 %v656, %v654
        %v757 = vpack.c.b16 %v659, %v657
        %v758 = vpack.c.b16 %v660, %v658
        %v759 = vpack.c.b16 %v663, %v661
        %v760 = vpack.c.b16 %v664, %v662
        %v761 = vpack.c.b16 %v667, %v665
        %v762 = vpack.c.b16 %v668, %v666
        %v763 = vpack.c.b16 %v671, %v669
        %v764 = vpack.c.b16 %v672, %v670
        %v765 = vpack.c.b16 %v675, %v673
        %v766 = vpack.c.b16 %v676, %v674
        %v767 = vpack.c.b16 %v679, %v677
        %v768 = vpack.c.b16 %v680, %v678
        %v769 = vpack.c.b16 %v683, %v681
        %v770 = vpack.c.b16 %v684, %v682
        %v771 = vpack.c.b16 %v687, %v685
        %v772 = vpack.c.b16 %v688, %v686
        %v773 = vpack.c.b16 %v691, %v689
        %v774 = vpack.c.b16 %v692, %v690
        %v775 = vpack.c.b16 %v695, %v693
        %v776 = vpack.c.b16 %v696, %v694
        %v777 = vpack.c.b16 %v699, %v697
        %v778 = vpack.c.b16 %v700, %v698
        %v779 = vpack.c.b16 %v703, %v701
        %v780 = vpack.c.b16 %v704, %v702
        %v781 = vpack.c.b16 %v707, %v705
        %v782 = vpack.c.b16 %v708, %v706
        %v783 = vpack.c.b16 %v711, %v709
        %v784 = vpack.c.b16 %v712, %v710
        %v785 = vpack.c.b16 %v715, %v713
        %v786 = vpack.c.b16 %v716, %v714
        %v787 = vpack.c.b16 %v719, %v717
        %v788 = vpack.c.b16 %v720, %v718
        %v789 = vpack.c.b16 %v723, %v721
        %v790 = vpack.c.b16 %v724, %v722
        %v791 = vpack.c.b16 %v727, %v725
        %v792 = vpack.c.b16 %v728, %v726
        %857 = vmatpush.bf16.msra.mxu0 %v743
        %858 = vmatpush.bf16.msra.mxu0 %v741
        %859 = vmatpush.bf16.msra.mxu0 %v739
        %860 = vmatpush.bf16.msra.mxu0 %v737
        %861 = vmatpush.bf16.msra.mxu0 %v735
        %862 = vmatpush.bf16.msra.mxu0 %v733
        %863 = vmatpush.bf16.msra.mxu0 %v731
        %864 = vmatpush.bf16.msra.mxu0 %v729
        %865 = vmatmul.bf16.gmra.mxu0 %v473
        %v866 = vpop.f32.mrf.mxu0
        %v867 = vadd.f32 %v373, %v866
        %v868 = vpop.f32.mrf.mxu0
        %v869 = vadd.f32 %v373, %v868
        %870 = vmatmul.bf16.gmra.mxu0 %v477
        %v871 = vpop.f32.mrf.mxu0
        %v872 = vadd.f32 %v373, %v871
        %v873 = vpop.f32.mrf.mxu0
        %v874 = vadd.f32 %v373, %v873
        %875 = vmatmul.bf16.gmra.mxu0 %v481
        %v876 = vpop.f32.mrf.mxu0
        %v877 = vadd.f32 %v373, %v876
        %v878 = vpop.f32.mrf.mxu0
        %v879 = vadd.f32 %v373, %v878
        %880 = vmatmul.bf16.gmra.mxu0 %v485
        %v881 = vpop.f32.mrf.mxu0
        %v882 = vadd.f32 %v373, %v881
        %v883 = vpop.f32.mrf.mxu0
        %v884 = vadd.f32 %v373, %v883
        %885 = vmatmul.bf16.gmra.mxu0 %v489
        %v886 = vpop.f32.mrf.mxu0
        %v887 = vadd.f32 %v373, %v886
        %v888 = vpop.f32.mrf.mxu0
        %v889 = vadd.f32 %v373, %v888
        %890 = vmatmul.bf16.gmra.mxu0 %v493
        %v891 = vpop.f32.mrf.mxu0
        %v892 = vadd.f32 %v373, %v891
        %v893 = vpop.f32.mrf.mxu0
        %v894 = vadd.f32 %v373, %v893
        %895 = vmatmul.bf16.gmra.mxu0 %v497
        %v896 = vpop.f32.mrf.mxu0
        %v897 = vadd.f32 %v373, %v896
        %v898 = vpop.f32.mrf.mxu0
        %v899 = vadd.f32 %v373, %v898
        %900 = vmatmul.bf16.gmra.mxu0 %v501
        %v901 = vpop.f32.mrf.mxu0
        %v902 = vadd.f32 %v373, %v901
        %v903 = vpop.f32.mrf.mxu0
        %v904 = vadd.f32 %v373, %v903
        %905 = vdwg.mxu0
        %906 = vmatpush.bf16.msra.mxu0 %v759
        %907 = vmatpush.bf16.msra.mxu0 %v757
        %908 = vmatpush.bf16.msra.mxu0 %v755
        %909 = vmatpush.bf16.msra.mxu0 %v753
        %910 = vmatpush.bf16.msra.mxu0 %v751
        %911 = vmatpush.bf16.msra.mxu0 %v749
        %912 = vmatpush.bf16.msra.mxu0 %v747
        %913 = vmatpush.bf16.msra.mxu0 %v745
        %914 = vmatmul.bf16.gmra.mxu0 %v474
        %v915 = vpop.f32.mrf.mxu0
        %v916 = vadd.f32 %v867, %v915
        %v917 = vpop.f32.mrf.mxu0
        %v918 = vadd.f32 %v869, %v917
        %919 = vmatmul.bf16.gmra.mxu0 %v478
        %v920 = vpop.f32.mrf.mxu0
        %v921 = vadd.f32 %v872, %v920
        %v922 = vpop.f32.mrf.mxu0
        %v923 = vadd.f32 %v874, %v922
        %924 = vmatmul.bf16.gmra.mxu0 %v482
        %v925 = vpop.f32.mrf.mxu0
        %v926 = vadd.f32 %v877, %v925
        %v927 = vpop.f32.mrf.mxu0
        %v928 = vadd.f32 %v879, %v927
        %929 = vmatmul.bf16.gmra.mxu0 %v486
        %v930 = vpop.f32.mrf.mxu0
        %v931 = vadd.f32 %v882, %v930
        %v932 = vpop.f32.mrf.mxu0
        %v933 = vadd.f32 %v884, %v932
        %934 = vmatmul.bf16.gmra.mxu0 %v490
        %v935 = vpop.f32.mrf.mxu0
        %v936 = vadd.f32 %v887, %v935
        %v937 = vpop.f32.mrf.mxu0
        %v938 = vadd.f32 %v889, %v937
        %939 = vmatmul.bf16.gmra.mxu0 %v494
        %v940 = vpop.f32.mrf.mxu0
        %v941 = vadd.f32 %v892, %v940
        %v942 = vpop.f32.mrf.mxu0
        %v943 = vadd.f32 %v894, %v942
        %944 = vmatmul.bf16.gmra.mxu0 %v498
        %v945 = vpop.f32.mrf.mxu0
        %v946 = vadd.f32 %v897, %v945
        %v947 = vpop.f32.mrf.mxu0
        %v948 = vadd.f32 %v899, %v947
        %949 = vmatmul.bf16.gmra.mxu0 %v502
        %v950 = vpop.f32.mrf.mxu0
        %v951 = vadd.f32 %v902, %v950
        %v952 = vpop.f32.mrf.mxu0
        %v953 = vadd.f32 %v904, %v952
        %954 = vdwg.mxu0
        %955 = vmatpush.bf16.msra.mxu0 %v775
        %956 = vmatpush.bf16.msra.mxu0 %v773
        %957 = vmatpush.bf16.msra.mxu0 %v771
        %958 = vmatpush.bf16.msra.mxu0 %v769
        %959 = vmatpush.bf16.msra.mxu0 %v767
        %960 = vmatpush.bf16.msra.mxu0 %v765
        %961 = vmatpush.bf16.msra.mxu0 %v763
        %962 = vmatpush.bf16.msra.mxu0 %v761
        %963 = vmatmul.bf16.gmra.mxu0 %v475
        %v964 = vpop.f32.mrf.mxu0
        %v965 = vadd.f32 %v916, %v964
        %v966 = vpop.f32.mrf.mxu0
        %v967 = vadd.f32 %v918, %v966
        %968 = vmatmul.bf16.gmra.mxu0 %v479
        %v969 = vpop.f32.mrf.mxu0
        %v970 = vadd.f32 %v921, %v969
        %v971 = vpop.f32.mrf.mxu0
        %v972 = vadd.f32 %v923, %v971
        %973 = vmatmul.bf16.gmra.mxu0 %v483
        %v974 = vpop.f32.mrf.mxu0
        %v975 = vadd.f32 %v926, %v974
        %v976 = vpop.f32.mrf.mxu0
        %v977 = vadd.f32 %v928, %v976
        %978 = vmatmul.bf16.gmra.mxu0 %v487
        %v979 = vpop.f32.mrf.mxu0
        %v980 = vadd.f32 %v931, %v979
        %v981 = vpop.f32.mrf.mxu0
        %v982 = vadd.f32 %v933, %v981
        %983 = vmatmul.bf16.gmra.mxu0 %v491
        %v984 = vpop.f32.mrf.mxu0
        %v985 = vadd.f32 %v936, %v984
        %v986 = vpop.f32.mrf.mxu0
        %v987 = vadd.f32 %v938, %v986
        %988 = vmatmul.bf16.gmra.mxu0 %v495
        %v989 = vpop.f32.mrf.mxu0
        %v990 = vadd.f32 %v941, %v989
        %v991 = vpop.f32.mrf.mxu0
        %v992 = vadd.f32 %v943, %v991
        %993 = vmatmul.bf16.gmra.mxu0 %v499
        %v994 = vpop.f32.mrf.mxu0
        %v995 = vadd.f32 %v946, %v994
        %v996 = vpop.f32.mrf.mxu0
        %v997 = vadd.f32 %v948, %v996
        %998 = vmatmul.bf16.gmra.mxu0 %v503
        %v999 = vpop.f32.mrf.mxu0
        %v1000 = vadd.f32 %v951, %v999
        %v1001 = vpop.f32.mrf.mxu0
        %v1002 = vadd.f32 %v953, %v1001
        %1003 = vdwg.mxu0
        %1004 = vmatpush.bf16.msra.mxu0 %v791
        %1005 = vmatpush.bf16.msra.mxu0 %v789
        %1006 = vmatpush.bf16.msra.mxu0 %v787
        %1007 = vmatpush.bf16.msra.mxu0 %v785
        %1008 = vmatpush.bf16.msra.mxu0 %v783
        %1009 = vmatpush.bf16.msra.mxu0 %v781
        %1010 = vmatpush.bf16.msra.mxu0 %v779
        %1011 = vmatpush.bf16.msra.mxu0 %v777
        %1012 = vmatmul.bf16.gmra.mxu0 %v476
        %v1013 = vpop.f32.mrf.mxu0
        %v1014 = vadd.f32 %v965, %v1013
        %v1015 = vpop.f32.mrf.mxu0
        %v1016 = vadd.f32 %v967, %v1015
        %1017 = vmatmul.bf16.gmra.mxu0 %v480
        %v1018 = vpop.f32.mrf.mxu0
        %v1019 = vadd.f32 %v970, %v1018
        %v1020 = vpop.f32.mrf.mxu0
        %v1021 = vadd.f32 %v972, %v1020
        %1022 = vmatmul.bf16.gmra.mxu0 %v484
        %v1023 = vpop.f32.mrf.mxu0
        %v1024 = vadd.f32 %v975, %v1023
        %v1025 = vpop.f32.mrf.mxu0
        %v1026 = vadd.f32 %v977, %v1025
        %1027 = vmatmul.bf16.gmra.mxu0 %v488
        %v1028 = vpop.f32.mrf.mxu0
        %v1029 = vadd.f32 %v980, %v1028
        %v1030 = vpop.f32.mrf.mxu0
        %v1031 = vadd.f32 %v982, %v1030
        %1032 = vmatmul.bf16.gmra.mxu0 %v492
        %v1033 = vpop.f32.mrf.mxu0
        %v1034 = vadd.f32 %v985, %v1033
        %v1035 = vpop.f32.mrf.mxu0
        %v1036 = vadd.f32 %v987, %v1035
        %1037 = vmatmul.bf16.gmra.mxu0 %v496
        %v1038 = vpop.f32.mrf.mxu0
        %v1039 = vadd.f32 %v990, %v1038
        %v1040 = vpop.f32.mrf.mxu0
        %v1041 = vadd.f32 %v992, %v1040
        %1042 = vmatmul.bf16.gmra.mxu0 %v500
        %v1043 = vpop.f32.mrf.mxu0
        %v1044 = vadd.f32 %v995, %v1043
        %v1045 = vpop.f32.mrf.mxu0
        %v1046 = vadd.f32 %v997, %v1045
        %1047 = vmatmul.bf16.gmra.mxu0 %v504
        %v1048 = vpop.f32.mrf.mxu0
        %v1049 = vadd.f32 %v1000, %v1048
        %v1050 = vpop.f32.mrf.mxu0
        %v1051 = vadd.f32 %v1002, %v1050
        %1052 = vdwg.mxu0
        %1053 = vmatpush.bf16.msra.mxu0 %v744
        %1054 = vmatpush.bf16.msra.mxu0 %v742
        %1055 = vmatpush.bf16.msra.mxu0 %v740
        %1056 = vmatpush.bf16.msra.mxu0 %v738
        %1057 = vmatpush.bf16.msra.mxu0 %v736
        %1058 = vmatpush.bf16.msra.mxu0 %v734
        %1059 = vmatpush.bf16.msra.mxu0 %v732
        %1060 = vmatpush.bf16.msra.mxu0 %v730
        %1061 = vmatmul.bf16.gmra.mxu0 %v473
        %v1062 = vpop.f32.mrf.mxu0
        %v1063 = vadd.f32 %v374, %v1062
        %v1064 = vpop.f32.mrf.mxu0
        %v1065 = vadd.f32 %v374, %v1064
        %1066 = vmatmul.bf16.gmra.mxu0 %v477
        %v1067 = vpop.f32.mrf.mxu0
        %v1068 = vadd.f32 %v374, %v1067
        %v1069 = vpop.f32.mrf.mxu0
        %v1070 = vadd.f32 %v374, %v1069
        %1071 = vmatmul.bf16.gmra.mxu0 %v481
        %v1072 = vpop.f32.mrf.mxu0
        %v1073 = vadd.f32 %v374, %v1072
        %v1074 = vpop.f32.mrf.mxu0
        %v1075 = vadd.f32 %v374, %v1074
        %1076 = vmatmul.bf16.gmra.mxu0 %v485
        %v1077 = vpop.f32.mrf.mxu0
        %v1078 = vadd.f32 %v374, %v1077
        %v1079 = vpop.f32.mrf.mxu0
        %v1080 = vadd.f32 %v374, %v1079
        %1081 = vmatmul.bf16.gmra.mxu0 %v489
        %v1082 = vpop.f32.mrf.mxu0
        %v1083 = vadd.f32 %v374, %v1082
        %v1084 = vpop.f32.mrf.mxu0
        %v1085 = vadd.f32 %v374, %v1084
        %1086 = vmatmul.bf16.gmra.mxu0 %v493
        %v1087 = vpop.f32.mrf.mxu0
        %v1088 = vadd.f32 %v374, %v1087
        %v1089 = vpop.f32.mrf.mxu0
        %v1090 = vadd.f32 %v374, %v1089
        %1091 = vmatmul.bf16.gmra.mxu0 %v497
        %v1092 = vpop.f32.mrf.mxu0
        %v1093 = vadd.f32 %v374, %v1092
        %v1094 = vpop.f32.mrf.mxu0
        %v1095 = vadd.f32 %v374, %v1094
        %1096 = vmatmul.bf16.gmra.mxu0 %v501
        %v1097 = vpop.f32.mrf.mxu0
        %v1098 = vadd.f32 %v374, %v1097
        %v1099 = vpop.f32.mrf.mxu0
        %v1100 = vadd.f32 %v374, %v1099
        %1101 = vdwg.mxu0
        %1102 = vmatpush.bf16.msra.mxu0 %v760
        %1103 = vmatpush.bf16.msra.mxu0 %v758
        %1104 = vmatpush.bf16.msra.mxu0 %v756
        %1105 = vmatpush.bf16.msra.mxu0 %v754
        %1106 = vmatpush.bf16.msra.mxu0 %v752
        %1107 = vmatpush.bf16.msra.mxu0 %v750
        %1108 = vmatpush.bf16.msra.mxu0 %v748
        %1109 = vmatpush.bf16.msra.mxu0 %v746
        %1110 = vmatmul.bf16.gmra.mxu0 %v474
        %v1111 = vpop.f32.mrf.mxu0
        %v1112 = vadd.f32 %v1063, %v1111
        %v1113 = vpop.f32.mrf.mxu0
        %v1114 = vadd.f32 %v1065, %v1113
        %1115 = vmatmul.bf16.gmra.mxu0 %v478
        %v1116 = vpop.f32.mrf.mxu0
        %v1117 = vadd.f32 %v1068, %v1116
        %v1118 = vpop.f32.mrf.mxu0
        %v1119 = vadd.f32 %v1070, %v1118
        %1120 = vmatmul.bf16.gmra.mxu0 %v482
        %v1121 = vpop.f32.mrf.mxu0
        %v1122 = vadd.f32 %v1073, %v1121
        %v1123 = vpop.f32.mrf.mxu0
        %v1124 = vadd.f32 %v1075, %v1123
        %1125 = vmatmul.bf16.gmra.mxu0 %v486
        %v1126 = vpop.f32.mrf.mxu0
        %v1127 = vadd.f32 %v1078, %v1126
        %v1128 = vpop.f32.mrf.mxu0
        %v1129 = vadd.f32 %v1080, %v1128
        %1130 = vmatmul.bf16.gmra.mxu0 %v490
        %v1131 = vpop.f32.mrf.mxu0
        %v1132 = vadd.f32 %v1083, %v1131
        %v1133 = vpop.f32.mrf.mxu0
        %v1134 = vadd.f32 %v1085, %v1133
        %1135 = vmatmul.bf16.gmra.mxu0 %v494
        %v1136 = vpop.f32.mrf.mxu0
        %v1137 = vadd.f32 %v1088, %v1136
        %v1138 = vpop.f32.mrf.mxu0
        %v1139 = vadd.f32 %v1090, %v1138
        %1140 = vmatmul.bf16.gmra.mxu0 %v498
        %v1141 = vpop.f32.mrf.mxu0
        %v1142 = vadd.f32 %v1093, %v1141
        %v1143 = vpop.f32.mrf.mxu0
        %v1144 = vadd.f32 %v1095, %v1143
        %1145 = vmatmul.bf16.gmra.mxu0 %v502
        %v1146 = vpop.f32.mrf.mxu0
        %v1147 = vadd.f32 %v1098, %v1146
        %v1148 = vpop.f32.mrf.mxu0
        %v1149 = vadd.f32 %v1100, %v1148
        %1150 = vdwg.mxu0
        %1151 = vmatpush.bf16.msra.mxu0 %v776
        %1152 = vmatpush.bf16.msra.mxu0 %v774
        %1153 = vmatpush.bf16.msra.mxu0 %v772
        %1154 = vmatpush.bf16.msra.mxu0 %v770
        %1155 = vmatpush.bf16.msra.mxu0 %v768
        %1156 = vmatpush.bf16.msra.mxu0 %v766
        %1157 = vmatpush.bf16.msra.mxu0 %v764
        %1158 = vmatpush.bf16.msra.mxu0 %v762
        %1159 = vmatmul.bf16.gmra.mxu0 %v475
        %v1160 = vpop.f32.mrf.mxu0
        %v1161 = vadd.f32 %v1112, %v1160
        %v1162 = vpop.f32.mrf.mxu0
        %v1163 = vadd.f32 %v1114, %v1162
        %1164 = vmatmul.bf16.gmra.mxu0 %v479
        %v1165 = vpop.f32.mrf.mxu0
        %v1166 = vadd.f32 %v1117, %v1165
        %v1167 = vpop.f32.mrf.mxu0
        %v1168 = vadd.f32 %v1119, %v1167
        %1169 = vmatmul.bf16.gmra.mxu0 %v483
        %v1170 = vpop.f32.mrf.mxu0
        %v1171 = vadd.f32 %v1122, %v1170
        %v1172 = vpop.f32.mrf.mxu0
        %v1173 = vadd.f32 %v1124, %v1172
        %1174 = vmatmul.bf16.gmra.mxu0 %v487
        %v1175 = vpop.f32.mrf.mxu0
        %v1176 = vadd.f32 %v1127, %v1175
        %v1177 = vpop.f32.mrf.mxu0
        %v1178 = vadd.f32 %v1129, %v1177
        %1179 = vmatmul.bf16.gmra.mxu0 %v491
        %v1180 = vpop.f32.mrf.mxu0
        %v1181 = vadd.f32 %v1132, %v1180
        %v1182 = vpop.f32.mrf.mxu0
        %v1183 = vadd.f32 %v1134, %v1182
        %1184 = vmatmul.bf16.gmra.mxu0 %v495
        %v1185 = vpop.f32.mrf.mxu0
        %v1186 = vadd.f32 %v1137, %v1185
        %v1187 = vpop.f32.mrf.mxu0
        %v1188 = vadd.f32 %v1139, %v1187
        %1189 = vmatmul.bf16.gmra.mxu0 %v499
        %v1190 = vpop.f32.mrf.mxu0
        %v1191 = vadd.f32 %v1142, %v1190
        %v1192 = vpop.f32.mrf.mxu0
        %v1193 = vadd.f32 %v1144, %v1192
        %1194 = vmatmul.bf16.gmra.mxu0 %v503
        %v1195 = vpop.f32.mrf.mxu0
        %v1196 = vadd.f32 %v1147, %v1195
        %v1197 = vpop.f32.mrf.mxu0
        %v1198 = vadd.f32 %v1149, %v1197
        %1199 = vdwg.mxu0
        %1200 = vmatpush.bf16.msra.mxu0 %v792
        %1201 = vmatpush.bf16.msra.mxu0 %v790
        %1202 = vmatpush.bf16.msra.mxu0 %v788
        %1203 = vmatpush.bf16.msra.mxu0 %v786
        %1204 = vmatpush.bf16.msra.mxu0 %v784
        %1205 = vmatpush.bf16.msra.mxu0 %v782
        %1206 = vmatpush.bf16.msra.mxu0 %v780
        %1207 = vmatpush.bf16.msra.mxu0 %v778
        %1208 = vmatmul.bf16.gmra.mxu0 %v476
        %v1209 = vpop.f32.mrf.mxu0
        %v1210 = vadd.f32 %v1161, %v1209
        %v1211 = vpop.f32.mrf.mxu0
        %v1212 = vadd.f32 %v1163, %v1211
        %1213 = vmatmul.bf16.gmra.mxu0 %v480
        %v1214 = vpop.f32.mrf.mxu0
        %v1215 = vadd.f32 %v1166, %v1214
        %v1216 = vpop.f32.mrf.mxu0
        %v1217 = vadd.f32 %v1168, %v1216
        %1218 = vmatmul.bf16.gmra.mxu0 %v484
        %v1219 = vpop.f32.mrf.mxu0
        %v1220 = vadd.f32 %v1171, %v1219
        %v1221 = vpop.f32.mrf.mxu0
        %v1222 = vadd.f32 %v1173, %v1221
        %1223 = vmatmul.bf16.gmra.mxu0 %v488
        %v1224 = vpop.f32.mrf.mxu0
        %v1225 = vadd.f32 %v1176, %v1224
        %v1226 = vpop.f32.mrf.mxu0
        %v1227 = vadd.f32 %v1178, %v1226
        %1228 = vmatmul.bf16.gmra.mxu0 %v492
        %v1229 = vpop.f32.mrf.mxu0
        %v1230 = vadd.f32 %v1181, %v1229
        %v1231 = vpop.f32.mrf.mxu0
        %v1232 = vadd.f32 %v1183, %v1231
        %1233 = vmatmul.bf16.gmra.mxu0 %v496
        %v1234 = vpop.f32.mrf.mxu0
        %v1235 = vadd.f32 %v1186, %v1234
        %v1236 = vpop.f32.mrf.mxu0
        %v1237 = vadd.f32 %v1188, %v1236
        %1238 = vmatmul.bf16.gmra.mxu0 %v500
        %v1239 = vpop.f32.mrf.mxu0
        %v1240 = vadd.f32 %v1191, %v1239
        %v1241 = vpop.f32.mrf.mxu0
        %v1242 = vadd.f32 %v1193, %v1241
        %1243 = vmatmul.bf16.gmra.mxu0 %v504
        %v1244 = vpop.f32.mrf.mxu0
        %v1245 = vadd.f32 %v1196, %v1244
        %v1246 = vpop.f32.mrf.mxu0
        %v1247 = vadd.f32 %v1198, %v1246
        %1248 = vdwg.mxu0
        %v1249 = vmul.f32 %v1014, 0.5
        %v1250 = vmul.f32 %v1210, 0.5
        %v1251 = vmul.f32 %v1016, 0.5
        %v1252 = vmul.f32 %v1212, 0.5
        %v1253 = vmul.f32 %v1019, 0.5
        %v1254 = vmul.f32 %v1215, 0.5
        %v1255 = vmul.f32 %v1021, 0.5
        %v1256 = vmul.f32 %v1217, 0.5
        %v1257 = vmul.f32 %v1024, 0.5
        %v1258 = vmul.f32 %v1220, 0.5
        %v1259 = vmul.f32 %v1026, 0.5
        %v1260 = vmul.f32 %v1222, 0.5
        %v1261 = vmul.f32 %v1029, 0.5
        %v1262 = vmul.f32 %v1225, 0.5
        %v1263 = vmul.f32 %v1031, 0.5
        %v1264 = vmul.f32 %v1227, 0.5
        %v1265 = vmul.f32 %v1034, 0.5
        %v1266 = vmul.f32 %v1230, 0.5
        %v1267 = vmul.f32 %v1036, 0.5
        %v1268 = vmul.f32 %v1232, 0.5
        %v1269 = vmul.f32 %v1039, 0.5
        %v1270 = vmul.f32 %v1235, 0.5
        %v1271 = vmul.f32 %v1041, 0.5
        %v1272 = vmul.f32 %v1237, 0.5
        %v1273 = vmul.f32 %v1044, 0.5
        %v1274 = vmul.f32 %v1240, 0.5
        %v1275 = vmul.f32 %v1046, 0.5
        %v1276 = vmul.f32 %v1242, 0.5
        %v1277 = vmul.f32 %v1049, 0.5
        %v1278 = vmul.f32 %v1245, 0.5
        %v1279 = vmul.f32 %v1051, 0.5
        %v1280 = vmul.f32 %v1247, 0.5
        %v1281 = vmul.f32 %v1014, 0.044715
        %v1282 = vmul.f32 %v1210, 0.044715
        %v1283 = vmul.f32 %v1016, 0.044715
        %v1284 = vmul.f32 %v1212, 0.044715
        %v1285 = vmul.f32 %v1019, 0.044715
        %v1286 = vmul.f32 %v1215, 0.044715
        %v1287 = vmul.f32 %v1021, 0.044715
        %v1288 = vmul.f32 %v1217, 0.044715
        %v1289 = vmul.f32 %v1024, 0.044715
        %v1290 = vmul.f32 %v1220, 0.044715
        %v1291 = vmul.f32 %v1026, 0.044715
        %v1292 = vmul.f32 %v1222, 0.044715
        %v1293 = vmul.f32 %v1029, 0.044715
        %v1294 = vmul.f32 %v1225, 0.044715
        %v1295 = vmul.f32 %v1031, 0.044715
        %v1296 = vmul.f32 %v1227, 0.044715
        %v1297 = vmul.f32 %v1034, 0.044715
        %v1298 = vmul.f32 %v1230, 0.044715
        %v1299 = vmul.f32 %v1036, 0.044715
        %v1300 = vmul.f32 %v1232, 0.044715
        %v1301 = vmul.f32 %v1039, 0.044715
        %v1302 = vmul.f32 %v1235, 0.044715
        %v1303 = vmul.f32 %v1041, 0.044715
        %v1304 = vmul.f32 %v1237, 0.044715
        %v1305 = vmul.f32 %v1044, 0.044715
        %v1306 = vmul.f32 %v1240, 0.044715
        %v1307 = vmul.f32 %v1046, 0.044715
        %v1308 = vmul.f32 %v1242, 0.044715
        %v1309 = vmul.f32 %v1049, 0.044715
        %v1310 = vmul.f32 %v1245, 0.044715
        %v1311 = vmul.f32 %v1051, 0.044715
        %v1312 = vmul.f32 %v1247, 0.044715
        %v1313 = vmul.f32 %v1281, %v1014
        %v1314 = vmul.f32 %v1282, %v1210
        %v1315 = vmul.f32 %v1283, %v1016
        %v1316 = vmul.f32 %v1284, %v1212
        %v1317 = vmul.f32 %v1285, %v1019
        %v1318 = vmul.f32 %v1286, %v1215
        %v1319 = vmul.f32 %v1287, %v1021
        %v1320 = vmul.f32 %v1288, %v1217
        %v1321 = vmul.f32 %v1289, %v1024
        %v1322 = vmul.f32 %v1290, %v1220
        %v1323 = vmul.f32 %v1291, %v1026
        %v1324 = vmul.f32 %v1292, %v1222
        %v1325 = vmul.f32 %v1293, %v1029
        %v1326 = vmul.f32 %v1294, %v1225
        %v1327 = vmul.f32 %v1295, %v1031
        %v1328 = vmul.f32 %v1296, %v1227
        %v1329 = vmul.f32 %v1297, %v1034
        %v1330 = vmul.f32 %v1298, %v1230
        %v1331 = vmul.f32 %v1299, %v1036
        %v1332 = vmul.f32 %v1300, %v1232
        %v1333 = vmul.f32 %v1301, %v1039
        %v1334 = vmul.f32 %v1302, %v1235
        %v1335 = vmul.f32 %v1303, %v1041
        %v1336 = vmul.f32 %v1304, %v1237
        %v1337 = vmul.f32 %v1305, %v1044
        %v1338 = vmul.f32 %v1306, %v1240
        %v1339 = vmul.f32 %v1307, %v1046
        %v1340 = vmul.f32 %v1308, %v1242
        %v1341 = vmul.f32 %v1309, %v1049
        %v1342 = vmul.f32 %v1310, %v1245
        %v1343 = vmul.f32 %v1311, %v1051
        %v1344 = vmul.f32 %v1312, %v1247
        %v1345 = vmul.f32 %v1313, %v1014
        %v1346 = vmul.f32 %v1314, %v1210
        %v1347 = vmul.f32 %v1315, %v1016
        %v1348 = vmul.f32 %v1316, %v1212
        %v1349 = vmul.f32 %v1317, %v1019
        %v1350 = vmul.f32 %v1318, %v1215
        %v1351 = vmul.f32 %v1319, %v1021
        %v1352 = vmul.f32 %v1320, %v1217
        %v1353 = vmul.f32 %v1321, %v1024
        %v1354 = vmul.f32 %v1322, %v1220
        %v1355 = vmul.f32 %v1323, %v1026
        %v1356 = vmul.f32 %v1324, %v1222
        %v1357 = vmul.f32 %v1325, %v1029
        %v1358 = vmul.f32 %v1326, %v1225
        %v1359 = vmul.f32 %v1327, %v1031
        %v1360 = vmul.f32 %v1328, %v1227
        %v1361 = vmul.f32 %v1329, %v1034
        %v1362 = vmul.f32 %v1330, %v1230
        %v1363 = vmul.f32 %v1331, %v1036
        %v1364 = vmul.f32 %v1332, %v1232
        %v1365 = vmul.f32 %v1333, %v1039
        %v1366 = vmul.f32 %v1334, %v1235
        %v1367 = vmul.f32 %v1335, %v1041
        %v1368 = vmul.f32 %v1336, %v1237
        %v1369 = vmul.f32 %v1337, %v1044
        %v1370 = vmul.f32 %v1338, %v1240
        %v1371 = vmul.f32 %v1339, %v1046
        %v1372 = vmul.f32 %v1340, %v1242
        %v1373 = vmul.f32 %v1341, %v1049
        %v1374 = vmul.f32 %v1342, %v1245
        %v1375 = vmul.f32 %v1343, %v1051
        %v1376 = vmul.f32 %v1344, %v1247
        %v1377 = vadd.f32 %v1014, %v1345
        %v1378 = vadd.f32 %v1210, %v1346
        %v1379 = vadd.f32 %v1016, %v1347
        %v1380 = vadd.f32 %v1212, %v1348
        %v1381 = vadd.f32 %v1019, %v1349
        %v1382 = vadd.f32 %v1215, %v1350
        %v1383 = vadd.f32 %v1021, %v1351
        %v1384 = vadd.f32 %v1217, %v1352
        %v1385 = vadd.f32 %v1024, %v1353
        %v1386 = vadd.f32 %v1220, %v1354
        %v1387 = vadd.f32 %v1026, %v1355
        %v1388 = vadd.f32 %v1222, %v1356
        %v1389 = vadd.f32 %v1029, %v1357
        %v1390 = vadd.f32 %v1225, %v1358
        %v1391 = vadd.f32 %v1031, %v1359
        %v1392 = vadd.f32 %v1227, %v1360
        %v1393 = vadd.f32 %v1034, %v1361
        %v1394 = vadd.f32 %v1230, %v1362
        %v1395 = vadd.f32 %v1036, %v1363
        %v1396 = vadd.f32 %v1232, %v1364
        %v1397 = vadd.f32 %v1039, %v1365
        %v1398 = vadd.f32 %v1235, %v1366
        %v1399 = vadd.f32 %v1041, %v1367
        %v1400 = vadd.f32 %v1237, %v1368
        %v1401 = vadd.f32 %v1044, %v1369
        %v1402 = vadd.f32 %v1240, %v1370
        %v1403 = vadd.f32 %v1046, %v1371
        %v1404 = vadd.f32 %v1242, %v1372
        %v1405 = vadd.f32 %v1049, %v1373
        %v1406 = vadd.f32 %v1245, %v1374
        %v1407 = vadd.f32 %v1051, %v1375
        %v1408 = vadd.f32 %v1247, %v1376
        %v1409 = vmul.f32 %v1377, 0.7978846
        %v1410 = vmul.f32 %v1378, 0.7978846
        %v1411 = vmul.f32 %v1379, 0.7978846
        %v1412 = vmul.f32 %v1380, 0.7978846
        %v1413 = vmul.f32 %v1381, 0.7978846
        %v1414 = vmul.f32 %v1382, 0.7978846
        %v1415 = vmul.f32 %v1383, 0.7978846
        %v1416 = vmul.f32 %v1384, 0.7978846
        %v1417 = vmul.f32 %v1385, 0.7978846
        %v1418 = vmul.f32 %v1386, 0.7978846
        %v1419 = vmul.f32 %v1387, 0.7978846
        %v1420 = vmul.f32 %v1388, 0.7978846
        %v1421 = vmul.f32 %v1389, 0.7978846
        %v1422 = vmul.f32 %v1390, 0.7978846
        %v1423 = vmul.f32 %v1391, 0.7978846
        %v1424 = vmul.f32 %v1392, 0.7978846
        %v1425 = vmul.f32 %v1393, 0.7978846
        %v1426 = vmul.f32 %v1394, 0.7978846
        %v1427 = vmul.f32 %v1395, 0.7978846
        %v1428 = vmul.f32 %v1396, 0.7978846
        %v1429 = vmul.f32 %v1397, 0.7978846
        %v1430 = vmul.f32 %v1398, 0.7978846
        %v1431 = vmul.f32 %v1399, 0.7978846
        %v1432 = vmul.f32 %v1400, 0.7978846
        %v1433 = vmul.f32 %v1401, 0.7978846
        %v1434 = vmul.f32 %v1402, 0.7978846
        %v1435 = vmul.f32 %v1403, 0.7978846
        %v1436 = vmul.f32 %v1404, 0.7978846
        %v1437 = vmul.f32 %v1405, 0.7978846
        %v1438 = vmul.f32 %v1406, 0.7978846
        %v1439 = vmul.f32 %v1407, 0.7978846
        %v1440 = vmul.f32 %v1408, 0.7978846
        %v1441 = vtanh.pop %v1409
        %v1442 = vtanh.pop %v1410
        %v1443 = vtanh.pop %v1411
        %v1444 = vtanh.pop %v1412
        %v1445 = vtanh.pop %v1413
        %v1446 = vtanh.pop %v1414
        %v1447 = vtanh.pop %v1415
        %v1448 = vtanh.pop %v1416
        %v1449 = vtanh.pop %v1417
        %v1450 = vtanh.pop %v1418
        %v1451 = vtanh.pop %v1419
        %v1452 = vtanh.pop %v1420
        %v1453 = vtanh.pop %v1421
        %v1454 = vtanh.pop %v1422
        %v1455 = vtanh.pop %v1423
        %v1456 = vtanh.pop %v1424
        %v1457 = vtanh.pop %v1425
        %v1458 = vtanh.pop %v1426
        %v1459 = vtanh.pop %v1427
        %v1460 = vtanh.pop %v1428
        %v1461 = vtanh.pop %v1429
        %v1462 = vtanh.pop %v1430
        %v1463 = vtanh.pop %v1431
        %v1464 = vtanh.pop %v1432
        %v1465 = vtanh.pop %v1433
        %v1466 = vtanh.pop %v1434
        %v1467 = vtanh.pop %v1435
        %v1468 = vtanh.pop %v1436
        %v1469 = vtanh.pop %v1437
        %v1470 = vtanh.pop %v1438
        %v1471 = vtanh.pop %v1439
        %v1472 = vtanh.pop %v1440
        %v1473 = vadd.f32 %v1441, 1.0
        %v1474 = vadd.f32 %v1442, 1.0
        %v1475 = vadd.f32 %v1443, 1.0
        %v1476 = vadd.f32 %v1444, 1.0
        %v1477 = vadd.f32 %v1445, 1.0
        %v1478 = vadd.f32 %v1446, 1.0
        %v1479 = vadd.f32 %v1447, 1.0
        %v1480 = vadd.f32 %v1448, 1.0
        %v1481 = vadd.f32 %v1449, 1.0
        %v1482 = vadd.f32 %v1450, 1.0
        %v1483 = vadd.f32 %v1451, 1.0
        %v1484 = vadd.f32 %v1452, 1.0
        %v1485 = vadd.f32 %v1453, 1.0
        %v1486 = vadd.f32 %v1454, 1.0
        %v1487 = vadd.f32 %v1455, 1.0
        %v1488 = vadd.f32 %v1456, 1.0
        %v1489 = vadd.f32 %v1457, 1.0
        %v1490 = vadd.f32 %v1458, 1.0
        %v1491 = vadd.f32 %v1459, 1.0
        %v1492 = vadd.f32 %v1460, 1.0
        %v1493 = vadd.f32 %v1461, 1.0
        %v1494 = vadd.f32 %v1462, 1.0
        %v1495 = vadd.f32 %v1463, 1.0
        %v1496 = vadd.f32 %v1464, 1.0
        %v1497 = vadd.f32 %v1465, 1.0
        %v1498 = vadd.f32 %v1466, 1.0
        %v1499 = vadd.f32 %v1467, 1.0
        %v1500 = vadd.f32 %v1468, 1.0
        %v1501 = vadd.f32 %v1469, 1.0
        %v1502 = vadd.f32 %v1470, 1.0
        %v1503 = vadd.f32 %v1471, 1.0
        %v1504 = vadd.f32 %v1472, 1.0
        %v1505 = vmul.f32 %v1249, %v1473
        %v1506 = vmul.f32 %v1250, %v1474
        %v1507 = vmul.f32 %v1251, %v1475
        %v1508 = vmul.f32 %v1252, %v1476
        %v1509 = vmul.f32 %v1253, %v1477
        %v1510 = vmul.f32 %v1254, %v1478
        %v1511 = vmul.f32 %v1255, %v1479
        %v1512 = vmul.f32 %v1256, %v1480
        %v1513 = vmul.f32 %v1257, %v1481
        %v1514 = vmul.f32 %v1258, %v1482
        %v1515 = vmul.f32 %v1259, %v1483
        %v1516 = vmul.f32 %v1260, %v1484
        %v1517 = vmul.f32 %v1261, %v1485
        %v1518 = vmul.f32 %v1262, %v1486
        %v1519 = vmul.f32 %v1263, %v1487
        %v1520 = vmul.f32 %v1264, %v1488
        %v1521 = vmul.f32 %v1265, %v1489
        %v1522 = vmul.f32 %v1266, %v1490
        %v1523 = vmul.f32 %v1267, %v1491
        %v1524 = vmul.f32 %v1268, %v1492
        %v1525 = vmul.f32 %v1269, %v1493
        %v1526 = vmul.f32 %v1270, %v1494
        %v1527 = vmul.f32 %v1271, %v1495
        %v1528 = vmul.f32 %v1272, %v1496
        %v1529 = vmul.f32 %v1273, %v1497
        %v1530 = vmul.f32 %v1274, %v1498
        %v1531 = vmul.f32 %v1275, %v1499
        %v1532 = vmul.f32 %v1276, %v1500
        %v1533 = vmul.f32 %v1277, %v1501
        %v1534 = vmul.f32 %v1278, %v1502
        %v1535 = vmul.f32 %v1279, %v1503
        %v1536 = vmul.f32 %v1280, %v1504
        %v1537 = vpack.c.bf16 %v1507, %v1505
        %v1538 = vpack.c.bf16 %v1508, %v1506
        %v1539 = vpack.c.bf16 %v1511, %v1509
        %v1540 = vpack.c.bf16 %v1512, %v1510
        %v1541 = vpack.c.bf16 %v1515, %v1513
        %v1542 = vpack.c.bf16 %v1516, %v1514
        %v1543 = vpack.c.bf16 %v1519, %v1517
        %v1544 = vpack.c.bf16 %v1520, %v1518
        %v1545 = vpack.c.bf16 %v1523, %v1521
        %v1546 = vpack.c.bf16 %v1524, %v1522
        %v1547 = vpack.c.bf16 %v1527, %v1525
        %v1548 = vpack.c.bf16 %v1528, %v1526
        %v1549 = vpack.c.bf16 %v1531, %v1529
        %v1550 = vpack.c.bf16 %v1532, %v1530
        %v1551 = vpack.c.bf16 %v1535, %v1533
        %v1552 = vpack.c.bf16 %v1536, %v1534
        %v1553 = vld [vmem:[#allocation7] sm:$0xff]
        %v1554 = vld [vmem:[#allocation7 + $0x8] sm:$0xff]
        %v1555 = vld [vmem:[#allocation7 + $0x10] sm:$0xff]
        %v1556 = vld [vmem:[#allocation7 + $0x18] sm:$0xff]
        %v1557 = vld [vmem:[#allocation7 + $0x20] sm:$0xff]
        %v1558 = vld [vmem:[#allocation7 + $0x28] sm:$0xff]
        %v1559 = vld [vmem:[#allocation7 + $0x30] sm:$0xff]
        %v1560 = vld [vmem:[#allocation7 + $0x38] sm:$0xff]
        %v1561 = vld [vmem:[#allocation7 + $0x40] sm:$0xff]
        %v1562 = vld [vmem:[#allocation7 + $0x48] sm:$0xff]
        %v1563 = vld [vmem:[#allocation7 + $0x50] sm:$0xff]
        %v1564 = vld [vmem:[#allocation7 + $0x58] sm:$0xff]
        %v1565 = vld [vmem:[#allocation7 + $0x60] sm:$0xff]
        %v1566 = vld [vmem:[#allocation7 + $0x68] sm:$0xff]
        %v1567 = vld [vmem:[#allocation7 + $0x70] sm:$0xff]
        %v1568 = vld [vmem:[#allocation7 + $0x78] sm:$0xff]
        %v1569 = vld [vmem:[#allocation7 + $0x80] sm:$0xff]
        %v1570 = vld [vmem:[#allocation7 + $0x88] sm:$0xff]
        %v1571 = vld [vmem:[#allocation7 + $0x90] sm:$0xff]
        %v1572 = vld [vmem:[#allocation7 + $0x98] sm:$0xff]
        %v1573 = vld [vmem:[#allocation7 + $0xa0] sm:$0xff]
        %v1574 = vld [vmem:[#allocation7 + $0xa8] sm:$0xff]
        %v1575 = vld [vmem:[#allocation7 + $0xb0] sm:$0xff]
        %v1576 = vld [vmem:[#allocation7 + $0xb8] sm:$0xff]
        %v1577 = vld [vmem:[#allocation7 + $0xc0] sm:$0xff]
        %v1578 = vld [vmem:[#allocation7 + $0xc8] sm:$0xff]
        %v1579 = vld [vmem:[#allocation7 + $0xd0] sm:$0xff]
        %v1580 = vld [vmem:[#allocation7 + $0xd8] sm:$0xff]
        %v1581 = vld [vmem:[#allocation7 + $0xe0] sm:$0xff]
        %v1582 = vld [vmem:[#allocation7 + $0xe8] sm:$0xff]
        %v1583 = vld [vmem:[#allocation7 + $0xf0] sm:$0xff]
        %v1584 = vld [vmem:[#allocation7 + $0xf8] sm:$0xff]
        %v1586 = vperm.slane %v303, 0
        %v1587 = vperm.slane %v303, 1
        %v1622 = vunpack.c.l.b16 %v1553
        %v1623 = vunpack.c.h.b16 %v1553
        %v1624 = vunpack.c.l.b16 %v1554
        %v1625 = vunpack.c.h.b16 %v1554
        %v1626 = vunpack.c.l.b16 %v1555
        %v1627 = vunpack.c.h.b16 %v1555
        %v1628 = vunpack.c.l.b16 %v1556
        %v1629 = vunpack.c.h.b16 %v1556
        %v1630 = vunpack.c.l.b16 %v1557
        %v1631 = vunpack.c.h.b16 %v1557
        %v1632 = vunpack.c.l.b16 %v1558
        %v1633 = vunpack.c.h.b16 %v1558
        %v1634 = vunpack.c.l.b16 %v1559
        %v1635 = vunpack.c.h.b16 %v1559
        %v1636 = vunpack.c.l.b16 %v1560
        %v1637 = vunpack.c.h.b16 %v1560
        %v1638 = vunpack.c.l.b16 %v1561
        %v1639 = vunpack.c.h.b16 %v1561
        %v1640 = vunpack.c.l.b16 %v1562
        %v1641 = vunpack.c.h.b16 %v1562
        %v1642 = vunpack.c.l.b16 %v1563
        %v1643 = vunpack.c.h.b16 %v1563
        %v1644 = vunpack.c.l.b16 %v1564
        %v1645 = vunpack.c.h.b16 %v1564
        %v1646 = vunpack.c.l.b16 %v1565
        %v1647 = vunpack.c.h.b16 %v1565
        %v1648 = vunpack.c.l.b16 %v1566
        %v1649 = vunpack.c.h.b16 %v1566
        %v1650 = vunpack.c.l.b16 %v1567
        %v1651 = vunpack.c.h.b16 %v1567
        %v1652 = vunpack.c.l.b16 %v1568
        %v1653 = vunpack.c.h.b16 %v1568
        %v1654 = vunpack.c.l.b16 %v1569
        %v1655 = vunpack.c.h.b16 %v1569
        %v1656 = vunpack.c.l.b16 %v1570
        %v1657 = vunpack.c.h.b16 %v1570
        %v1658 = vunpack.c.l.b16 %v1571
        %v1659 = vunpack.c.h.b16 %v1571
        %v1660 = vunpack.c.l.b16 %v1572
        %v1661 = vunpack.c.h.b16 %v1572
        %v1662 = vunpack.c.l.b16 %v1573
        %v1663 = vunpack.c.h.b16 %v1573
        %v1664 = vunpack.c.l.b16 %v1574
        %v1665 = vunpack.c.h.b16 %v1574
        %v1666 = vunpack.c.l.b16 %v1575
        %v1667 = vunpack.c.h.b16 %v1575
        %v1668 = vunpack.c.l.b16 %v1576
        %v1669 = vunpack.c.h.b16 %v1576
        %v1670 = vunpack.c.l.b16 %v1577
        %v1671 = vunpack.c.h.b16 %v1577
        %v1672 = vunpack.c.l.b16 %v1578
        %v1673 = vunpack.c.h.b16 %v1578
        %v1674 = vunpack.c.l.b16 %v1579
        %v1675 = vunpack.c.h.b16 %v1579
        %v1676 = vunpack.c.l.b16 %v1580
        %v1677 = vunpack.c.h.b16 %v1580
        %v1678 = vunpack.c.l.b16 %v1581
        %v1679 = vunpack.c.h.b16 %v1581
        %v1680 = vunpack.c.l.b16 %v1582
        %v1681 = vunpack.c.h.b16 %v1582
        %v1682 = vunpack.c.l.b16 %v1583
        %v1683 = vunpack.c.h.b16 %v1583
        %v1684 = vunpack.c.l.b16 %v1584
        %v1685 = vunpack.c.h.b16 %v1584
        %v1686 = vpack.c.b16 %v1624, %v1622
        %v1687 = vpack.c.b16 %v1625, %v1623
        %v1688 = vpack.c.b16 %v1628, %v1626
        %v1689 = vpack.c.b16 %v1629, %v1627
        %v1690 = vpack.c.b16 %v1632, %v1630
        %v1691 = vpack.c.b16 %v1633, %v1631
        %v1692 = vpack.c.b16 %v1636, %v1634
        %v1693 = vpack.c.b16 %v1637, %v1635
        %v1694 = vpack.c.b16 %v1640, %v1638
        %v1695 = vpack.c.b16 %v1641, %v1639
        %v1696 = vpack.c.b16 %v1644, %v1642
        %v1697 = vpack.c.b16 %v1645, %v1643
        %v1698 = vpack.c.b16 %v1648, %v1646
        %v1699 = vpack.c.b16 %v1649, %v1647
        %v1700 = vpack.c.b16 %v1652, %v1650
        %v1701 = vpack.c.b16 %v1653, %v1651
        %v1702 = vpack.c.b16 %v1656, %v1654
        %v1703 = vpack.c.b16 %v1657, %v1655
        %v1704 = vpack.c.b16 %v1660, %v1658
        %v1705 = vpack.c.b16 %v1661, %v1659
        %v1706 = vpack.c.b16 %v1664, %v1662
        %v1707 = vpack.c.b16 %v1665, %v1663
        %v1708 = vpack.c.b16 %v1668, %v1666
        %v1709 = vpack.c.b16 %v1669, %v1667
        %v1710 = vpack.c.b16 %v1672, %v1670
        %v1711 = vpack.c.b16 %v1673, %v1671
        %v1712 = vpack.c.b16 %v1676, %v1674
        %v1713 = vpack.c.b16 %v1677, %v1675
        %v1714 = vpack.c.b16 %v1680, %v1678
        %v1715 = vpack.c.b16 %v1681, %v1679
        %v1716 = vpack.c.b16 %v1684, %v1682
        %v1717 = vpack.c.b16 %v1685, %v1683
        %1750 = vmatpush.bf16.msra.mxu0 %v1700
        %1751 = vmatpush.bf16.msra.mxu0 %v1698
        %1752 = vmatpush.bf16.msra.mxu0 %v1696
        %1753 = vmatpush.bf16.msra.mxu0 %v1694
        %1754 = vmatpush.bf16.msra.mxu0 %v1692
        %1755 = vmatpush.bf16.msra.mxu0 %v1690
        %1756 = vmatpush.bf16.msra.mxu0 %v1688
        %1757 = vmatpush.bf16.msra.mxu0 %v1686
        %1758 = vmatmul.bf16.gmra.mxu0 %v1537
        %v1759 = vpop.f32.mrf.mxu0
        %v1760 = vadd.f32 %v1586, %v1759
        %v1761 = vpop.f32.mrf.mxu0
        %v1762 = vadd.f32 %v1586, %v1761
        %1763 = vmatmul.bf16.gmra.mxu0 %v1539
        %v1764 = vpop.f32.mrf.mxu0
        %v1765 = vadd.f32 %v1586, %v1764
        %v1766 = vpop.f32.mrf.mxu0
        %v1767 = vadd.f32 %v1586, %v1766
        %1768 = vmatmul.bf16.gmra.mxu0 %v1541
        %v1769 = vpop.f32.mrf.mxu0
        %v1770 = vadd.f32 %v1586, %v1769
        %v1771 = vpop.f32.mrf.mxu0
        %v1772 = vadd.f32 %v1586, %v1771
        %1773 = vmatmul.bf16.gmra.mxu0 %v1543
        %v1774 = vpop.f32.mrf.mxu0
        %v1775 = vadd.f32 %v1586, %v1774
        %v1776 = vpop.f32.mrf.mxu0
        %v1777 = vadd.f32 %v1586, %v1776
        %1778 = vmatmul.bf16.gmra.mxu0 %v1545
        %v1779 = vpop.f32.mrf.mxu0
        %v1780 = vadd.f32 %v1586, %v1779
        %v1781 = vpop.f32.mrf.mxu0
        %v1782 = vadd.f32 %v1586, %v1781
        %1783 = vmatmul.bf16.gmra.mxu0 %v1547
        %v1784 = vpop.f32.mrf.mxu0
        %v1785 = vadd.f32 %v1586, %v1784
        %v1786 = vpop.f32.mrf.mxu0
        %v1787 = vadd.f32 %v1586, %v1786
        %1788 = vmatmul.bf16.gmra.mxu0 %v1549
        %v1789 = vpop.f32.mrf.mxu0
        %v1790 = vadd.f32 %v1586, %v1789
        %v1791 = vpop.f32.mrf.mxu0
        %v1792 = vadd.f32 %v1586, %v1791
        %1793 = vmatmul.bf16.gmra.mxu0 %v1551
        %v1794 = vpop.f32.mrf.mxu0
        %v1795 = vadd.f32 %v1586, %v1794
        %v1796 = vpop.f32.mrf.mxu0
        %v1797 = vadd.f32 %v1586, %v1796
        %1798 = vdwg.mxu0
        %1799 = vmatpush.bf16.msra.mxu0 %v1716
        %1800 = vmatpush.bf16.msra.mxu0 %v1714
        %1801 = vmatpush.bf16.msra.mxu0 %v1712
        %1802 = vmatpush.bf16.msra.mxu0 %v1710
        %1803 = vmatpush.bf16.msra.mxu0 %v1708
        %1804 = vmatpush.bf16.msra.mxu0 %v1706
        %1805 = vmatpush.bf16.msra.mxu0 %v1704
        %1806 = vmatpush.bf16.msra.mxu0 %v1702
        %1807 = vmatmul.bf16.gmra.mxu0 %v1538
        %v1808 = vpop.f32.mrf.mxu0
        %v1809 = vadd.f32 %v1760, %v1808
        %v1810 = vpop.f32.mrf.mxu0
        %v1811 = vadd.f32 %v1762, %v1810
        %1812 = vmatmul.bf16.gmra.mxu0 %v1540
        %v1813 = vpop.f32.mrf.mxu0
        %v1814 = vadd.f32 %v1765, %v1813
        %v1815 = vpop.f32.mrf.mxu0
        %v1816 = vadd.f32 %v1767, %v1815
        %1817 = vmatmul.bf16.gmra.mxu0 %v1542
        %v1818 = vpop.f32.mrf.mxu0
        %v1819 = vadd.f32 %v1770, %v1818
        %v1820 = vpop.f32.mrf.mxu0
        %v1821 = vadd.f32 %v1772, %v1820
        %1822 = vmatmul.bf16.gmra.mxu0 %v1544
        %v1823 = vpop.f32.mrf.mxu0
        %v1824 = vadd.f32 %v1775, %v1823
        %v1825 = vpop.f32.mrf.mxu0
        %v1826 = vadd.f32 %v1777, %v1825
        %1827 = vmatmul.bf16.gmra.mxu0 %v1546
        %v1828 = vpop.f32.mrf.mxu0
        %v1829 = vadd.f32 %v1780, %v1828
        %v1830 = vpop.f32.mrf.mxu0
        %v1831 = vadd.f32 %v1782, %v1830
        %1832 = vmatmul.bf16.gmra.mxu0 %v1548
        %v1833 = vpop.f32.mrf.mxu0
        %v1834 = vadd.f32 %v1785, %v1833
        %v1835 = vpop.f32.mrf.mxu0
        %v1836 = vadd.f32 %v1787, %v1835
        %1837 = vmatmul.bf16.gmra.mxu0 %v1550
        %v1838 = vpop.f32.mrf.mxu0
        %v1839 = vadd.f32 %v1790, %v1838
        %v1840 = vpop.f32.mrf.mxu0
        %v1841 = vadd.f32 %v1792, %v1840
        %1842 = vmatmul.bf16.gmra.mxu0 %v1552
        %v1843 = vpop.f32.mrf.mxu0
        %v1844 = vadd.f32 %v1795, %v1843
        %v1845 = vpop.f32.mrf.mxu0
        %v1846 = vadd.f32 %v1797, %v1845
        %1847 = vdwg.mxu0
        %1848 = vmatpush.bf16.msra.mxu0 %v1701
        %1849 = vmatpush.bf16.msra.mxu0 %v1699
        %1850 = vmatpush.bf16.msra.mxu0 %v1697
        %1851 = vmatpush.bf16.msra.mxu0 %v1695
        %1852 = vmatpush.bf16.msra.mxu0 %v1693
        %1853 = vmatpush.bf16.msra.mxu0 %v1691
        %1854 = vmatpush.bf16.msra.mxu0 %v1689
        %1855 = vmatpush.bf16.msra.mxu0 %v1687
        %1856 = vmatmul.bf16.gmra.mxu0 %v1537
        %v1857 = vpop.f32.mrf.mxu0
        %v1858 = vadd.f32 %v1587, %v1857
        %v1859 = vpop.f32.mrf.mxu0
        %v1860 = vadd.f32 %v1587, %v1859
        %1861 = vmatmul.bf16.gmra.mxu0 %v1539
        %v1862 = vpop.f32.mrf.mxu0
        %v1863 = vadd.f32 %v1587, %v1862
        %v1864 = vpop.f32.mrf.mxu0
        %v1865 = vadd.f32 %v1587, %v1864
        %1866 = vmatmul.bf16.gmra.mxu0 %v1541
        %v1867 = vpop.f32.mrf.mxu0
        %v1868 = vadd.f32 %v1587, %v1867
        %v1869 = vpop.f32.mrf.mxu0
        %v1870 = vadd.f32 %v1587, %v1869
        %1871 = vmatmul.bf16.gmra.mxu0 %v1543
        %v1872 = vpop.f32.mrf.mxu0
        %v1873 = vadd.f32 %v1587, %v1872
        %v1874 = vpop.f32.mrf.mxu0
        %v1875 = vadd.f32 %v1587, %v1874
        %1876 = vmatmul.bf16.gmra.mxu0 %v1545
        %v1877 = vpop.f32.mrf.mxu0
        %v1878 = vadd.f32 %v1587, %v1877
        %v1879 = vpop.f32.mrf.mxu0
        %v1880 = vadd.f32 %v1587, %v1879
        %1881 = vmatmul.bf16.gmra.mxu0 %v1547
        %v1882 = vpop.f32.mrf.mxu0
        %v1883 = vadd.f32 %v1587, %v1882
        %v1884 = vpop.f32.mrf.mxu0
        %v1885 = vadd.f32 %v1587, %v1884
        %1886 = vmatmul.bf16.gmra.mxu0 %v1549
        %v1887 = vpop.f32.mrf.mxu0
        %v1888 = vadd.f32 %v1587, %v1887
        %v1889 = vpop.f32.mrf.mxu0
        %v1890 = vadd.f32 %v1587, %v1889
        %1891 = vmatmul.bf16.gmra.mxu0 %v1551
        %v1892 = vpop.f32.mrf.mxu0
        %v1893 = vadd.f32 %v1587, %v1892
        %v1894 = vpop.f32.mrf.mxu0
        %v1895 = vadd.f32 %v1587, %v1894
        %1896 = vdwg.mxu0
        %1897 = vmatpush.bf16.msra.mxu0 %v1717
        %1898 = vmatpush.bf16.msra.mxu0 %v1715
        %1899 = vmatpush.bf16.msra.mxu0 %v1713
        %1900 = vmatpush.bf16.msra.mxu0 %v1711
        %1901 = vmatpush.bf16.msra.mxu0 %v1709
        %1902 = vmatpush.bf16.msra.mxu0 %v1707
        %1903 = vmatpush.bf16.msra.mxu0 %v1705
        %1904 = vmatpush.bf16.msra.mxu0 %v1703
        %1905 = vmatmul.bf16.gmra.mxu0 %v1538
        %v1906 = vpop.f32.mrf.mxu0
        %v1907 = vadd.f32 %v1858, %v1906
        %v1908 = vpop.f32.mrf.mxu0
        %v1909 = vadd.f32 %v1860, %v1908
        %1910 = vmatmul.bf16.gmra.mxu0 %v1540
        %v1911 = vpop.f32.mrf.mxu0
        %v1912 = vadd.f32 %v1863, %v1911
        %v1913 = vpop.f32.mrf.mxu0
        %v1914 = vadd.f32 %v1865, %v1913
        %1915 = vmatmul.bf16.gmra.mxu0 %v1542
        %v1916 = vpop.f32.mrf.mxu0
        %v1917 = vadd.f32 %v1868, %v1916
        %v1918 = vpop.f32.mrf.mxu0
        %v1919 = vadd.f32 %v1870, %v1918
        %1920 = vmatmul.bf16.gmra.mxu0 %v1544
        %v1921 = vpop.f32.mrf.mxu0
        %v1922 = vadd.f32 %v1873, %v1921
        %v1923 = vpop.f32.mrf.mxu0
        %v1924 = vadd.f32 %v1875, %v1923
        %1925 = vmatmul.bf16.gmra.mxu0 %v1546
        %v1926 = vpop.f32.mrf.mxu0
        %v1927 = vadd.f32 %v1878, %v1926
        %v1928 = vpop.f32.mrf.mxu0
        %v1929 = vadd.f32 %v1880, %v1928
        %1930 = vmatmul.bf16.gmra.mxu0 %v1548
        %v1931 = vpop.f32.mrf.mxu0
        %v1932 = vadd.f32 %v1883, %v1931
        %v1933 = vpop.f32.mrf.mxu0
        %v1934 = vadd.f32 %v1885, %v1933
        %1935 = vmatmul.bf16.gmra.mxu0 %v1550
        %v1936 = vpop.f32.mrf.mxu0
        %v1937 = vadd.f32 %v1888, %v1936
        %v1938 = vpop.f32.mrf.mxu0
        %v1939 = vadd.f32 %v1890, %v1938
        %1940 = vmatmul.bf16.gmra.mxu0 %v1552
        %v1941 = vpop.f32.mrf.mxu0
        %v1942 = vadd.f32 %v1893, %v1941
        %v1943 = vpop.f32.mrf.mxu0
        %v1944 = vadd.f32 %v1895, %v1943
        %1945 = vdwg.mxu0
        %v1946 = vadd.f32 %v1809, %v1014
        %v1947 = vadd.f32 %v1907, %v1210
        %v1948 = vadd.f32 %v1811, %v1016
        %v1949 = vadd.f32 %v1909, %v1212
        %v1950 = vadd.f32 %v1814, %v1019
        %v1951 = vadd.f32 %v1912, %v1215
        %v1952 = vadd.f32 %v1816, %v1021
        %v1953 = vadd.f32 %v1914, %v1217
        %v1954 = vadd.f32 %v1819, %v1024
        %v1955 = vadd.f32 %v1917, %v1220
        %v1956 = vadd.f32 %v1821, %v1026
        %v1957 = vadd.f32 %v1919, %v1222
        %v1958 = vadd.f32 %v1824, %v1029
        %v1959 = vadd.f32 %v1922, %v1225
        %v1960 = vadd.f32 %v1826, %v1031
        %v1961 = vadd.f32 %v1924, %v1227
        %v1962 = vadd.f32 %v1829, %v1034
        %v1963 = vadd.f32 %v1927, %v1230
        %v1964 = vadd.f32 %v1831, %v1036
        %v1965 = vadd.f32 %v1929, %v1232
        %v1966 = vadd.f32 %v1834, %v1039
        %v1967 = vadd.f32 %v1932, %v1235
        %v1968 = vadd.f32 %v1836, %v1041
        %v1969 = vadd.f32 %v1934, %v1237
        %v1970 = vadd.f32 %v1839, %v1044
        %v1971 = vadd.f32 %v1937, %v1240
        %v1972 = vadd.f32 %v1841, %v1046
        %v1973 = vadd.f32 %v1939, %v1242
        %v1974 = vadd.f32 %v1844, %v1049
        %v1975 = vadd.f32 %v1942, %v1245
        %v1976 = vadd.f32 %v1846, %v1051
        %v1977 = vadd.f32 %v1944, %v1247
        %v1978 = vadd.f32 %v1946, %v1947
        %1979 = vadd.xlane.f32.xlu0 %v1978
        %v1980 = vpop.xlane.xlu0 %1979
        %v1981 = vadd.f32 %v1948, %v1949
        %1982 = vadd.xlane.f32.xlu0 %v1981
        %v1983 = vpop.xlane.xlu0 %1982
        %v1984 = vadd.f32 %v1950, %v1951
        %1985 = vadd.xlane.f32.xlu0 %v1984
        %v1986 = vpop.xlane.xlu0 %1985
        %v1987 = vadd.f32 %v1952, %v1953
        %1988 = vadd.xlane.f32.xlu0 %v1987
        %v1989 = vpop.xlane.xlu0 %1988
        %v1990 = vadd.f32 %v1954, %v1955
        %1991 = vadd.xlane.f32.xlu0 %v1990
        %v1992 = vpop.xlane.xlu0 %1991
        %v1993 = vadd.f32 %v1956, %v1957
        %1994 = vadd.xlane.f32.xlu0 %v1993
        %v1995 = vpop.xlane.xlu0 %1994
        %v1996 = vadd.f32 %v1958, %v1959
        %1997 = vadd.xlane.f32.xlu0 %v1996
        %v1998 = vpop.xlane.xlu0 %1997
        %v1999 = vadd.f32 %v1960, %v1961
        %2000 = vadd.xlane.f32.xlu0 %v1999
        %v2001 = vpop.xlane.xlu0 %2000
        %v2002 = vadd.f32 %v1962, %v1963
        %2003 = vadd.xlane.f32.xlu0 %v2002
        %v2004 = vpop.xlane.xlu0 %2003
        %v2005 = vadd.f32 %v1964, %v1965
        %2006 = vadd.xlane.f32.xlu0 %v2005
        %v2007 = vpop.xlane.xlu0 %2006
        %v2008 = vadd.f32 %v1966, %v1967
        %2009 = vadd.xlane.f32.xlu0 %v2008
        %v2010 = vpop.xlane.xlu0 %2009
        %v2011 = vadd.f32 %v1968, %v1969
        %2012 = vadd.xlane.f32.xlu0 %v2011
        %v2013 = vpop.xlane.xlu0 %2012
        %v2014 = vadd.f32 %v1970, %v1971
        %2015 = vadd.xlane.f32.xlu0 %v2014
        %v2016 = vpop.xlane.xlu0 %2015
        %v2017 = vadd.f32 %v1972, %v1973
        %2018 = vadd.xlane.f32.xlu0 %v2017
        %v2019 = vpop.xlane.xlu0 %2018
        %v2020 = vadd.f32 %v1974, %v1975
        %2021 = vadd.xlane.f32.xlu0 %v2020
        %v2022 = vpop.xlane.xlu0 %2021
        %v2023 = vadd.f32 %v1976, %v1977
        %2024 = vadd.xlane.f32.xlu0 %v2023
        %v2025 = vpop.xlane.xlu0 %2024
        %v2026 = vmul.f32 %v1946, %v1946
        %v2027 = vmul.f32 %v1947, %v1947
        %v2028 = vmul.f32 %v1948, %v1948
        %v2029 = vmul.f32 %v1949, %v1949
        %v2030 = vmul.f32 %v1950, %v1950
        %v2031 = vmul.f32 %v1951, %v1951
        %v2032 = vmul.f32 %v1952, %v1952
        %v2033 = vmul.f32 %v1953, %v1953
        %v2034 = vmul.f32 %v1954, %v1954
        %v2035 = vmul.f32 %v1955, %v1955
        %v2036 = vmul.f32 %v1956, %v1956
        %v2037 = vmul.f32 %v1957, %v1957
        %v2038 = vmul.f32 %v1958, %v1958
        %v2039 = vmul.f32 %v1959, %v1959
        %v2040 = vmul.f32 %v1960, %v1960
        %v2041 = vmul.f32 %v1961, %v1961
        %v2042 = vmul.f32 %v1962, %v1962
        %v2043 = vmul.f32 %v1963, %v1963
        %v2044 = vmul.f32 %v1964, %v1964
        %v2045 = vmul.f32 %v1965, %v1965
        %v2046 = vmul.f32 %v1966, %v1966
        %v2047 = vmul.f32 %v1967, %v1967
        %v2048 = vmul.f32 %v1968, %v1968
        %v2049 = vmul.f32 %v1969, %v1969
        %v2050 = vmul.f32 %v1970, %v1970
        %v2051 = vmul.f32 %v1971, %v1971
        %v2052 = vmul.f32 %v1972, %v1972
        %v2053 = vmul.f32 %v1973, %v1973
        %v2054 = vmul.f32 %v1974, %v1974
        %v2055 = vmul.f32 %v1975, %v1975
        %v2056 = vmul.f32 %v1976, %v1976
        %v2057 = vmul.f32 %v1977, %v1977
        %v2058 = vadd.f32 %v2026, %v2027
        %2059 = vadd.xlane.f32.xlu0 %v2058
        %v2060 = vpop.xlane.xlu0 %2059
        %v2061 = vadd.f32 %v2028, %v2029
        %2062 = vadd.xlane.f32.xlu0 %v2061
        %v2063 = vpop.xlane.xlu0 %2062
        %v2064 = vadd.f32 %v2030, %v2031
        %2065 = vadd.xlane.f32.xlu0 %v2064
        %v2066 = vpop.xlane.xlu0 %2065
        %v2067 = vadd.f32 %v2032, %v2033
        %2068 = vadd.xlane.f32.xlu0 %v2067
        %v2069 = vpop.xlane.xlu0 %2068
        %v2070 = vadd.f32 %v2034, %v2035
        %2071 = vadd.xlane.f32.xlu0 %v2070
        %v2072 = vpop.xlane.xlu0 %2071
        %v2073 = vadd.f32 %v2036, %v2037
        %2074 = vadd.xlane.f32.xlu0 %v2073
        %v2075 = vpop.xlane.xlu0 %2074
        %v2076 = vadd.f32 %v2038, %v2039
        %2077 = vadd.xlane.f32.xlu0 %v2076
        %v2078 = vpop.xlane.xlu0 %2077
        %v2079 = vadd.f32 %v2040, %v2041
        %2080 = vadd.xlane.f32.xlu0 %v2079
        %v2081 = vpop.xlane.xlu0 %2080
        %v2082 = vadd.f32 %v2042, %v2043
        %2083 = vadd.xlane.f32.xlu0 %v2082
        %v2084 = vpop.xlane.xlu0 %2083
        %v2085 = vadd.f32 %v2044, %v2045
        %2086 = vadd.xlane.f32.xlu0 %v2085
        %v2087 = vpop.xlane.xlu0 %2086
        %v2088 = vadd.f32 %v2046, %v2047
        %2089 = vadd.xlane.f32.xlu0 %v2088
        %v2090 = vpop.xlane.xlu0 %2089
        %v2091 = vadd.f32 %v2048, %v2049
        %2092 = vadd.xlane.f32.xlu0 %v2091
        %v2093 = vpop.xlane.xlu0 %2092
        %v2094 = vadd.f32 %v2050, %v2051
        %2095 = vadd.xlane.f32.xlu0 %v2094
        %v2096 = vpop.xlane.xlu0 %2095
        %v2097 = vadd.f32 %v2052, %v2053
        %2098 = vadd.xlane.f32.xlu0 %v2097
        %v2099 = vpop.xlane.xlu0 %2098
        %v2100 = vadd.f32 %v2054, %v2055
        %2101 = vadd.xlane.f32.xlu0 %v2100
        %v2102 = vpop.xlane.xlu0 %2101
        %v2103 = vadd.f32 %v2056, %v2057
        %2104 = vadd.xlane.f32.xlu0 %v2103
        %v2105 = vpop.xlane.xlu0 %2104
        %v2106 = vmul.f32 %v1980, 0.00390625
        %v2107 = vmul.f32 %v1983, 0.00390625
        %v2108 = vmul.f32 %v1986, 0.00390625
        %v2109 = vmul.f32 %v1989, 0.00390625
        %v2110 = vmul.f32 %v1992, 0.00390625
        %v2111 = vmul.f32 %v1995, 0.00390625
        %v2112 = vmul.f32 %v1998, 0.00390625
        %v2113 = vmul.f32 %v2001, 0.00390625
        %v2114 = vmul.f32 %v2004, 0.00390625
        %v2115 = vmul.f32 %v2007, 0.00390625
        %v2116 = vmul.f32 %v2010, 0.00390625
        %v2117 = vmul.f32 %v2013, 0.00390625
        %v2118 = vmul.f32 %v2016, 0.00390625
        %v2119 = vmul.f32 %v2019, 0.00390625
        %v2120 = vmul.f32 %v2022, 0.00390625
        %v2121 = vmul.f32 %v2025, 0.00390625
        %v2122 = vmul.f32 %v2060, 0.00390625
        %v2123 = vmul.f32 %v2063, 0.00390625
        %v2124 = vmul.f32 %v2066, 0.00390625
        %v2125 = vmul.f32 %v2069, 0.00390625
        %v2126 = vmul.f32 %v2072, 0.00390625
        %v2127 = vmul.f32 %v2075, 0.00390625
        %v2128 = vmul.f32 %v2078, 0.00390625
        %v2129 = vmul.f32 %v2081, 0.00390625
        %v2130 = vmul.f32 %v2084, 0.00390625
        %v2131 = vmul.f32 %v2087, 0.00390625
        %v2132 = vmul.f32 %v2090, 0.00390625
        %v2133 = vmul.f32 %v2093, 0.00390625
        %v2134 = vmul.f32 %v2096, 0.00390625
        %v2135 = vmul.f32 %v2099, 0.00390625
        %v2136 = vmul.f32 %v2102, 0.00390625
        %v2137 = vmul.f32 %v2105, 0.00390625
        %v2138 = vmul.f32 %v2106, %v2106
        %v2139 = vmul.f32 %v2107, %v2107
        %v2140 = vmul.f32 %v2108, %v2108
        %v2141 = vmul.f32 %v2109, %v2109
        %v2142 = vmul.f32 %v2110, %v2110
        %v2143 = vmul.f32 %v2111, %v2111
        %v2144 = vmul.f32 %v2112, %v2112
        %v2145 = vmul.f32 %v2113, %v2113
        %v2146 = vmul.f32 %v2114, %v2114
        %v2147 = vmul.f32 %v2115, %v2115
        %v2148 = vmul.f32 %v2116, %v2116
        %v2149 = vmul.f32 %v2117, %v2117
        %v2150 = vmul.f32 %v2118, %v2118
        %v2151 = vmul.f32 %v2119, %v2119
        %v2152 = vmul.f32 %v2120, %v2120
        %v2153 = vmul.f32 %v2121, %v2121
        %v2154 = vsub.f32 %v2122, %v2138
        %v2155 = vsub.f32 %v2123, %v2139
        %v2156 = vsub.f32 %v2124, %v2140
        %v2157 = vsub.f32 %v2125, %v2141
        %v2158 = vsub.f32 %v2126, %v2142
        %v2159 = vsub.f32 %v2127, %v2143
        %v2160 = vsub.f32 %v2128, %v2144
        %v2161 = vsub.f32 %v2129, %v2145
        %v2162 = vsub.f32 %v2130, %v2146
        %v2163 = vsub.f32 %v2131, %v2147
        %v2164 = vsub.f32 %v2132, %v2148
        %v2165 = vsub.f32 %v2133, %v2149
        %v2166 = vsub.f32 %v2134, %v2150
        %v2167 = vsub.f32 %v2135, %v2151
        %v2168 = vsub.f32 %v2136, %v2152
        %v2169 = vsub.f32 %v2137, %v2153
        %v2170 = vadd.f32 %v2154, 1e-05
        %v2171 = vadd.f32 %v2155, 1e-05
        %v2172 = vadd.f32 %v2156, 1e-05
        %v2173 = vadd.f32 %v2157, 1e-05
        %v2174 = vadd.f32 %v2158, 1e-05
        %v2175 = vadd.f32 %v2159, 1e-05
        %v2176 = vadd.f32 %v2160, 1e-05
        %v2177 = vadd.f32 %v2161, 1e-05
        %v2178 = vadd.f32 %v2162, 1e-05
        %v2179 = vadd.f32 %v2163, 1e-05
        %v2180 = vadd.f32 %v2164, 1e-05
        %v2181 = vadd.f32 %v2165, 1e-05
        %v2182 = vadd.f32 %v2166, 1e-05
        %v2183 = vadd.f32 %v2167, 1e-05
        %v2184 = vadd.f32 %v2168, 1e-05
        %v2185 = vadd.f32 %v2169, 1e-05
        %v2186 = vrsqrt.pop %v2170
        %v2187 = vmul.f32 %v2186, %v2170
        %v2188 = vmul.f32 %v2187, %v2186
        %v2189 = vmul.f32 0.5, %v2188
        %v2190 = vsub.f32 1.5, %v2189
        %v2191 = vmul.f32 %v2186, %v2190
        %vm2192 = vweird.f32 %v2170
        %vm2193 = vweird.f32 %v2186
        %vm2194 = vmor %vm2192, %vm2193
        %v2195 = vsel %vm2194, %v2186, %v2191
        %v2196 = vrsqrt.pop %v2171
        %v2197 = vmul.f32 %v2196, %v2171
        %v2198 = vmul.f32 %v2197, %v2196
        %v2199 = vmul.f32 0.5, %v2198
        %v2200 = vsub.f32 1.5, %v2199
        %v2201 = vmul.f32 %v2196, %v2200
        %vm2202 = vweird.f32 %v2171
        %vm2203 = vweird.f32 %v2196
        %vm2204 = vmor %vm2202, %vm2203
        %v2205 = vsel %vm2204, %v2196, %v2201
        %v2206 = vrsqrt.pop %v2172
        %v2207 = vmul.f32 %v2206, %v2172
        %v2208 = vmul.f32 %v2207, %v2206
        %v2209 = vmul.f32 0.5, %v2208
        %v2210 = vsub.f32 1.5, %v2209
        %v2211 = vmul.f32 %v2206, %v2210
        %vm2212 = vweird.f32 %v2172
        %vm2213 = vweird.f32 %v2206
        %vm2214 = vmor %vm2212, %vm2213
        %v2215 = vsel %vm2214, %v2206, %v2211
        %v2216 = vrsqrt.pop %v2173
        %v2217 = vmul.f32 %v2216, %v2173
        %v2218 = vmul.f32 %v2217, %v2216
        %v2219 = vmul.f32 0.5, %v2218
        %v2220 = vsub.f32 1.5, %v2219
        %v2221 = vmul.f32 %v2216, %v2220
        %vm2222 = vweird.f32 %v2173
        %vm2223 = vweird.f32 %v2216
        %vm2224 = vmor %vm2222, %vm2223
        %v2225 = vsel %vm2224, %v2216, %v2221
        %v2226 = vrsqrt.pop %v2174
        %v2227 = vmul.f32 %v2226, %v2174
        %v2228 = vmul.f32 %v2227, %v2226
        %v2229 = vmul.f32 0.5, %v2228
        %v2230 = vsub.f32 1.5, %v2229
        %v2231 = vmul.f32 %v2226, %v2230
        %vm2232 = vweird.f32 %v2174
        %vm2233 = vweird.f32 %v2226
        %vm2234 = vmor %vm2232, %vm2233
        %v2235 = vsel %vm2234, %v2226, %v2231
        %v2236 = vrsqrt.pop %v2175
        %v2237 = vmul.f32 %v2236, %v2175
        %v2238 = vmul.f32 %v2237, %v2236
        %v2239 = vmul.f32 0.5, %v2238
        %v2240 = vsub.f32 1.5, %v2239
        %v2241 = vmul.f32 %v2236, %v2240
        %vm2242 = vweird.f32 %v2175
        %vm2243 = vweird.f32 %v2236
        %vm2244 = vmor %vm2242, %vm2243
        %v2245 = vsel %vm2244, %v2236, %v2241
        %v2246 = vrsqrt.pop %v2176
        %v2247 = vmul.f32 %v2246, %v2176
        %v2248 = vmul.f32 %v2247, %v2246
        %v2249 = vmul.f32 0.5, %v2248
        %v2250 = vsub.f32 1.5, %v2249
        %v2251 = vmul.f32 %v2246, %v2250
        %vm2252 = vweird.f32 %v2176
        %vm2253 = vweird.f32 %v2246
        %vm2254 = vmor %vm2252, %vm2253
        %v2255 = vsel %vm2254, %v2246, %v2251
        %v2256 = vrsqrt.pop %v2177
        %v2257 = vmul.f32 %v2256, %v2177
        %v2258 = vmul.f32 %v2257, %v2256
        %v2259 = vmul.f32 0.5, %v2258
        %v2260 = vsub.f32 1.5, %v2259
        %v2261 = vmul.f32 %v2256, %v2260
        %vm2262 = vweird.f32 %v2177
        %vm2263 = vweird.f32 %v2256
        %vm2264 = vmor %vm2262, %vm2263
        %v2265 = vsel %vm2264, %v2256, %v2261
        %v2266 = vrsqrt.pop %v2178
        %v2267 = vmul.f32 %v2266, %v2178
        %v2268 = vmul.f32 %v2267, %v2266
        %v2269 = vmul.f32 0.5, %v2268
        %v2270 = vsub.f32 1.5, %v2269
        %v2271 = vmul.f32 %v2266, %v2270
        %vm2272 = vweird.f32 %v2178
        %vm2273 = vweird.f32 %v2266
        %vm2274 = vmor %vm2272, %vm2273
        %v2275 = vsel %vm2274, %v2266, %v2271
        %v2276 = vrsqrt.pop %v2179
        %v2277 = vmul.f32 %v2276, %v2179
        %v2278 = vmul.f32 %v2277, %v2276
        %v2279 = vmul.f32 0.5, %v2278
        %v2280 = vsub.f32 1.5, %v2279
        %v2281 = vmul.f32 %v2276, %v2280
        %vm2282 = vweird.f32 %v2179
        %vm2283 = vweird.f32 %v2276
        %vm2284 = vmor %vm2282, %vm2283
        %v2285 = vsel %vm2284, %v2276, %v2281
        %v2286 = vrsqrt.pop %v2180
        %v2287 = vmul.f32 %v2286, %v2180
        %v2288 = vmul.f32 %v2287, %v2286
        %v2289 = vmul.f32 0.5, %v2288
        %v2290 = vsub.f32 1.5, %v2289
        %v2291 = vmul.f32 %v2286, %v2290
        %vm2292 = vweird.f32 %v2180
        %vm2293 = vweird.f32 %v2286
        %vm2294 = vmor %vm2292, %vm2293
        %v2295 = vsel %vm2294, %v2286, %v2291
        %v2296 = vrsqrt.pop %v2181
        %v2297 = vmul.f32 %v2296, %v2181
        %v2298 = vmul.f32 %v2297, %v2296
        %v2299 = vmul.f32 0.5, %v2298
        %v2300 = vsub.f32 1.5, %v2299
        %v2301 = vmul.f32 %v2296, %v2300
        %vm2302 = vweird.f32 %v2181
        %vm2303 = vweird.f32 %v2296
        %vm2304 = vmor %vm2302, %vm2303
        %v2305 = vsel %vm2304, %v2296, %v2301
        %v2306 = vrsqrt.pop %v2182
        %v2307 = vmul.f32 %v2306, %v2182
        %v2308 = vmul.f32 %v2307, %v2306
        %v2309 = vmul.f32 0.5, %v2308
        %v2310 = vsub.f32 1.5, %v2309
        %v2311 = vmul.f32 %v2306, %v2310
        %vm2312 = vweird.f32 %v2182
        %vm2313 = vweird.f32 %v2306
        %vm2314 = vmor %vm2312, %vm2313
        %v2315 = vsel %vm2314, %v2306, %v2311
        %v2316 = vrsqrt.pop %v2183
        %v2317 = vmul.f32 %v2316, %v2183
        %v2318 = vmul.f32 %v2317, %v2316
        %v2319 = vmul.f32 0.5, %v2318
        %v2320 = vsub.f32 1.5, %v2319
        %v2321 = vmul.f32 %v2316, %v2320
        %vm2322 = vweird.f32 %v2183
        %vm2323 = vweird.f32 %v2316
        %vm2324 = vmor %vm2322, %vm2323
        %v2325 = vsel %vm2324, %v2316, %v2321
        %v2326 = vrsqrt.pop %v2184
        %v2327 = vmul.f32 %v2326, %v2184
        %v2328 = vmul.f32 %v2327, %v2326
        %v2329 = vmul.f32 0.5, %v2328
        %v2330 = vsub.f32 1.5, %v2329
        %v2331 = vmul.f32 %v2326, %v2330
        %vm2332 = vweird.f32 %v2184
        %vm2333 = vweird.f32 %v2326
        %vm2334 = vmor %vm2332, %vm2333
        %v2335 = vsel %vm2334, %v2326, %v2331
        %v2336 = vrsqrt.pop %v2185
        %v2337 = vmul.f32 %v2336, %v2185
        %v2338 = vmul.f32 %v2337, %v2336
        %v2339 = vmul.f32 0.5, %v2338
        %v2340 = vsub.f32 1.5, %v2339
        %v2341 = vmul.f32 %v2336, %v2340
        %vm2342 = vweird.f32 %v2185
        %vm2343 = vweird.f32 %v2336
        %vm2344 = vmor %vm2342, %vm2343
        %v2345 = vsel %vm2344, %v2336, %v2341
        %v2347 = vperm.slane %v305, 0
        %v2348 = vperm.slane %v305, 1
        %v2351 = vmul.f32 %v2347, %v2195
        %v2352 = vmul.f32 %v2348, %v2195
        %v2353 = vmul.f32 %v2347, %v2205
        %v2354 = vmul.f32 %v2348, %v2205
        %v2355 = vmul.f32 %v2347, %v2215
        %v2356 = vmul.f32 %v2348, %v2215
        %v2357 = vmul.f32 %v2347, %v2225
        %v2358 = vmul.f32 %v2348, %v2225
        %v2359 = vmul.f32 %v2347, %v2235
        %v2360 = vmul.f32 %v2348, %v2235
        %v2361 = vmul.f32 %v2347, %v2245
        %v2362 = vmul.f32 %v2348, %v2245
        %v2363 = vmul.f32 %v2347, %v2255
        %v2364 = vmul.f32 %v2348, %v2255
        %v2365 = vmul.f32 %v2347, %v2265
        %v2366 = vmul.f32 %v2348, %v2265
        %v2367 = vmul.f32 %v2347, %v2275
        %v2368 = vmul.f32 %v2348, %v2275
        %v2369 = vmul.f32 %v2347, %v2285
        %v2370 = vmul.f32 %v2348, %v2285
        %v2371 = vmul.f32 %v2347, %v2295
        %v2372 = vmul.f32 %v2348, %v2295
        %v2373 = vmul.f32 %v2347, %v2305
        %v2374 = vmul.f32 %v2348, %v2305
        %v2375 = vmul.f32 %v2347, %v2315
        %v2376 = vmul.f32 %v2348, %v2315
        %v2377 = vmul.f32 %v2347, %v2325
        %v2378 = vmul.f32 %v2348, %v2325
        %v2379 = vmul.f32 %v2347, %v2335
        %v2380 = vmul.f32 %v2348, %v2335
        %v2381 = vmul.f32 %v2347, %v2345
        %v2382 = vmul.f32 %v2348, %v2345
        %v2383 = vmul.f32 %v1946, %v2351
        %v2384 = vmul.f32 %v1947, %v2352
        %v2385 = vmul.f32 %v1948, %v2353
        %v2386 = vmul.f32 %v1949, %v2354
        %v2387 = vmul.f32 %v1950, %v2355
        %v2388 = vmul.f32 %v1951, %v2356
        %v2389 = vmul.f32 %v1952, %v2357
        %v2390 = vmul.f32 %v1953, %v2358
        %v2391 = vmul.f32 %v1954, %v2359
        %v2392 = vmul.f32 %v1955, %v2360
        %v2393 = vmul.f32 %v1956, %v2361
        %v2394 = vmul.f32 %v1957, %v2362
        %v2395 = vmul.f32 %v1958, %v2363
        %v2396 = vmul.f32 %v1959, %v2364
        %v2397 = vmul.f32 %v1960, %v2365
        %v2398 = vmul.f32 %v1961, %v2366
        %v2399 = vmul.f32 %v1962, %v2367
        %v2400 = vmul.f32 %v1963, %v2368
        %v2401 = vmul.f32 %v1964, %v2369
        %v2402 = vmul.f32 %v1965, %v2370
        %v2403 = vmul.f32 %v1966, %v2371
        %v2404 = vmul.f32 %v1967, %v2372
        %v2405 = vmul.f32 %v1968, %v2373
        %v2406 = vmul.f32 %v1969, %v2374
        %v2407 = vmul.f32 %v1970, %v2375
        %v2408 = vmul.f32 %v1971, %v2376
        %v2409 = vmul.f32 %v1972, %v2377
        %v2410 = vmul.f32 %v1973, %v2378
        %v2411 = vmul.f32 %v1974, %v2379
        %v2412 = vmul.f32 %v1975, %v2380
        %v2413 = vmul.f32 %v1976, %v2381
        %v2414 = vmul.f32 %v1977, %v2382
        %v2415 = vmul.f32 %v2106, %v2351
        %v2416 = vmul.f32 %v2106, %v2352
        %v2417 = vmul.f32 %v2107, %v2353
        %v2418 = vmul.f32 %v2107, %v2354
        %v2419 = vmul.f32 %v2108, %v2355
        %v2420 = vmul.f32 %v2108, %v2356
        %v2421 = vmul.f32 %v2109, %v2357
        %v2422 = vmul.f32 %v2109, %v2358
        %v2423 = vmul.f32 %v2110, %v2359
        %v2424 = vmul.f32 %v2110, %v2360
        %v2425 = vmul.f32 %v2111, %v2361
        %v2426 = vmul.f32 %v2111, %v2362
        %v2427 = vmul.f32 %v2112, %v2363
        %v2428 = vmul.f32 %v2112, %v2364
        %v2429 = vmul.f32 %v2113, %v2365
        %v2430 = vmul.f32 %v2113, %v2366
        %v2431 = vmul.f32 %v2114, %v2367
        %v2432 = vmul.f32 %v2114, %v2368
        %v2433 = vmul.f32 %v2115, %v2369
        %v2434 = vmul.f32 %v2115, %v2370
        %v2435 = vmul.f32 %v2116, %v2371
        %v2436 = vmul.f32 %v2116, %v2372
        %v2437 = vmul.f32 %v2117, %v2373
        %v2438 = vmul.f32 %v2117, %v2374
        %v2439 = vmul.f32 %v2118, %v2375
        %v2440 = vmul.f32 %v2118, %v2376
        %v2441 = vmul.f32 %v2119, %v2377
        %v2442 = vmul.f32 %v2119, %v2378
        %v2443 = vmul.f32 %v2120, %v2379
        %v2444 = vmul.f32 %v2120, %v2380
        %v2445 = vmul.f32 %v2121, %v2381
        %v2446 = vmul.f32 %v2121, %v2382
        %v2448 = vperm.slane %v307, 0
        %v2449 = vperm.slane %v307, 1
        %v2452 = vsub.f32 %v2448, %v2415
        %v2453 = vsub.f32 %v2449, %v2416
        %v2454 = vsub.f32 %v2448, %v2417
        %v2455 = vsub.f32 %v2449, %v2418
        %v2456 = vsub.f32 %v2448, %v2419
        %v2457 = vsub.f32 %v2449, %v2420
        %v2458 = vsub.f32 %v2448, %v2421
        %v2459 = vsub.f32 %v2449, %v2422
        %v2460 = vsub.f32 %v2448, %v2423
        %v2461 = vsub.f32 %v2449, %v2424
        %v2462 = vsub.f32 %v2448, %v2425
        %v2463 = vsub.f32 %v2449, %v2426
        %v2464 = vsub.f32 %v2448, %v2427
        %v2465 = vsub.f32 %v2449, %v2428
        %v2466 = vsub.f32 %v2448, %v2429
        %v2467 = vsub.f32 %v2449, %v2430
        %v2468 = vsub.f32 %v2448, %v2431
        %v2469 = vsub.f32 %v2449, %v2432
        %v2470 = vsub.f32 %v2448, %v2433
        %v2471 = vsub.f32 %v2449, %v2434
        %v2472 = vsub.f32 %v2448, %v2435
        %v2473 = vsub.f32 %v2449, %v2436
        %v2474 = vsub.f32 %v2448, %v2437
        %v2475 = vsub.f32 %v2449, %v2438
        %v2476 = vsub.f32 %v2448, %v2439
        %v2477 = vsub.f32 %v2449, %v2440
        %v2478 = vsub.f32 %v2448, %v2441
        %v2479 = vsub.f32 %v2449, %v2442
        %v2480 = vsub.f32 %v2448, %v2443
        %v2481 = vsub.f32 %v2449, %v2444
        %v2482 = vsub.f32 %v2448, %v2445
        %v2483 = vsub.f32 %v2449, %v2446
        %v2484 = vadd.f32 %v2383, %v2452
        %v2485 = vadd.f32 %v2384, %v2453
        %v2486 = vadd.f32 %v2385, %v2454
        %v2487 = vadd.f32 %v2386, %v2455
        %v2488 = vadd.f32 %v2387, %v2456
        %v2489 = vadd.f32 %v2388, %v2457
        %v2490 = vadd.f32 %v2389, %v2458
        %v2491 = vadd.f32 %v2390, %v2459
        %v2492 = vadd.f32 %v2391, %v2460
        %v2493 = vadd.f32 %v2392, %v2461
        %v2494 = vadd.f32 %v2393, %v2462
        %v2495 = vadd.f32 %v2394, %v2463
        %v2496 = vadd.f32 %v2395, %v2464
        %v2497 = vadd.f32 %v2396, %v2465
        %v2498 = vadd.f32 %v2397, %v2466
        %v2499 = vadd.f32 %v2398, %v2467
        %v2500 = vadd.f32 %v2399, %v2468
        %v2501 = vadd.f32 %v2400, %v2469
        %v2502 = vadd.f32 %v2401, %v2470
        %v2503 = vadd.f32 %v2402, %v2471
        %v2504 = vadd.f32 %v2403, %v2472
        %v2505 = vadd.f32 %v2404, %v2473
        %v2506 = vadd.f32 %v2405, %v2474
        %v2507 = vadd.f32 %v2406, %v2475
        %v2508 = vadd.f32 %v2407, %v2476
        %v2509 = vadd.f32 %v2408, %v2477
        %v2510 = vadd.f32 %v2409, %v2478
        %v2511 = vadd.f32 %v2410, %v2479
        %v2512 = vadd.f32 %v2411, %v2480
        %v2513 = vadd.f32 %v2412, %v2481
        %v2514 = vadd.f32 %v2413, %v2482
        %v2515 = vadd.f32 %v2414, %v2483
        %2516 = vst [vmem:[%s266] sm:$0xff] %v2484
        %2517 = vst [vmem:[%s266 + $0x8] sm:$0xff] %v2485
        %2518 = vst [vmem:[%s266 + $0x10] sm:$0xff] %v2486
        %2519 = vst [vmem:[%s266 + $0x18] sm:$0xff] %v2487
        %2520 = vst [vmem:[%s266 + $0x20] sm:$0xff] %v2488
        %2521 = vst [vmem:[%s266 + $0x28] sm:$0xff] %v2489
        %2522 = vst [vmem:[%s266 + $0x30] sm:$0xff] %v2490
        %2523 = vst [vmem:[%s266 + $0x38] sm:$0xff] %v2491
        %2524 = vst [vmem:[%s266 + $0x40] sm:$0xff] %v2492
        %2525 = vst [vmem:[%s266 + $0x48] sm:$0xff] %v2493
        %2526 = vst [vmem:[%s266 + $0x50] sm:$0xff] %v2494
        %2527 = vst [vmem:[%s266 + $0x58] sm:$0xff] %v2495
        %2528 = vst [vmem:[%s266 + $0x60] sm:$0xff] %v2496
        %2529 = vst [vmem:[%s266 + $0x68] sm:$0xff] %v2497
        %2530 = vst [vmem:[%s266 + $0x70] sm:$0xff] %v2498
        %2531 = vst [vmem:[%s266 + $0x78] sm:$0xff] %v2499
        %2532 = vst [vmem:[%s266 + $0x80] sm:$0xff] %v2500
        %2533 = vst [vmem:[%s266 + $0x88] sm:$0xff] %v2501
        %2534 = vst [vmem:[%s266 + $0x90] sm:$0xff] %v2502
        %2535 = vst [vmem:[%s266 + $0x98] sm:$0xff] %v2503
        %2536 = vst [vmem:[%s266 + $0xa0] sm:$0xff] %v2504
        %2537 = vst [vmem:[%s266 + $0xa8] sm:$0xff] %v2505
        %2538 = vst [vmem:[%s266 + $0xb0] sm:$0xff] %v2506
        %2539 = vst [vmem:[%s266 + $0xb8] sm:$0xff] %v2507
        %2540 = vst [vmem:[%s266 + $0xc0] sm:$0xff] %v2508
        %2541 = vst [vmem:[%s266 + $0xc8] sm:$0xff] %v2509
        %2542 = vst [vmem:[%s266 + $0xd0] sm:$0xff] %v2510
        %2543 = vst [vmem:[%s266 + $0xd8] sm:$0xff] %v2511
        %2544 = vst [vmem:[%s266 + $0xe0] sm:$0xff] %v2512
        %2545 = vst [vmem:[%s266 + $0xe8] sm:$0xff] %v2513
        %2546 = vst [vmem:[%s266 + $0xf0] sm:$0xff] %v2514
        %2547 = vst [vmem:[%s266 + $0xf8] sm:$0xff] %v2515
        %s2548 = sand.u32 %s120, 1
        %s2549 = scalar_lea.sflag [#allocation4], %s2548
        %s2550 = sand.u32 %s120, 1
        %s2551 = smul.addr %s2550, 256
        %s2552 = scalar_lea.vmem [#allocation10], %s2551
        // Predicated region
        $region53: #{tpu_custom_call.1} parent=35 // pred_check
          %p2553 = pneg %p130
        $region54: #{tpu_custom_call.1} parent=35 // pred_check_branch
          %2555 = sbr.rel (%p2553) target = $region56
        $region55: #{tpu_custom_call.1} parent=35 // pred_region
          %s2556 = smul.u32 16, %s23
          %2558 = vsyncadd %s2549, 0
          %s2559 = smul.addr %s2556, 2
          %s2560 = smul.addr %s2559, 8
          %s2561 = scalar_lea.hbm %s4, %s2560
          %s2562 = sshll.u32 %s2552, 4
          %s2563 = int_to_ptr.vmem [resolvable:$true] %s2562
          %s2564 = sshll.u32 %s2561, 4
          %s2565 = int_to_ptr.hbm [resolvable:$true] %s2564
          %2570 = dma.vmem_to_hbm [thread:$0]  %s2563, 4096, %s2565, %s2549, 256, 256, 16
        $region56: #{tpu_custom_call.1} parent=35 // pred_fallthru
          _
      $region36: #{tpu_custom_call.1} parent=5 // pred_fallthru
        _
      %p2571 = scmp.le.s32.totalorder 2, %s18
      // Predicated region
      $region57: #{tpu_custom_call.1} parent=5 // pred_check
        %p2572 = pneg %p2571
      $region58: #{tpu_custom_call.1} parent=5 // pred_check_branch
        %2574 = sbr.rel (%p2572) target = $region60
      $region59: #{tpu_custom_call.1} parent=5 // pred_region
        %s2575 = ssub.s32 %s18, 2
        // Predicated region
        $region61: #{tpu_custom_call.1} parent=59 // pred_check
          %p2576 = pneg %p136
        $region62: #{tpu_custom_call.1} parent=59 // pred_check_branch
          %2578 = sbr.rel (%p2576) target = $region64
        $region63: #{tpu_custom_call.1} parent=59 // pred_region
          %s2579 = sand.u32 %s121, 1
          %s2580 = scalar_lea.sflag [#allocation4], %s2579
          %s2581 = sand.u32 %s121, 1
          %s2582 = smul.addr %s2581, 256
          %s2583 = scalar_lea.vmem [#allocation10], %s2582
          %2585 = dma.done %s2580, 4096
        $region64: #{tpu_custom_call.1} parent=59 // pred_fallthru
          _
      $region60: #{tpu_custom_call.1} parent=5 // pred_fallthru
        _
    $region6: #{tpu_custom_call.1} parent=1 // loop_footer
      %s22 = sadd.s32 1, %s18
    $region7: #{tpu_custom_call.1} parent=1 // loop_footer_branch
      %17 = sbr.rel target = $region3
    $region8: #{tpu_custom_call.1} parent=1 // loop_exit
      _
    %2586 = vsyncpa [#allocation3], 1
    %s2587 = scalar_lea.sflag [#allocation3], 1
    %2588 = vsyncpa %s2587, 1
    %2589 = vsyncpa [#allocation6], 1
    %2590 = vsyncpa [#allocation9], 1
    %2591 = vsyncpa [#allocation4], 1
    %s2592 = scalar_lea.sflag [#allocation4], 1
    %2593 = vsyncpa %s2592, 1

</llo_original>
